<compile_context>
chip_gen: v7x
topology: tpu7x:2x2x1
jax: 0.10.0
libtpu: 0.0.40
codegen_flags: <defaults>
</compile_context>

<pallas_src>
import jax
import jax.numpy as jnp
from jax.experimental import pallas as pl
from jax.experimental.pallas import tpu as pltpu

NEG = -1e30            # Python float literal -> folded into the kernel jaxpr
CHUNK = 8              # neighbor / node chunk (one sublane tile)
BF16 = jnp.bfloat16
VMEM_SPEC = pl.BlockSpec(memory_space=pltpu.MemorySpace.VMEM)


# ------------------------------ fused kernel ------------------------------- #

def _fused_kernel(x_ref, adj_ref, mask_ref,
                  wl_ref, bl_ref, wua_ref, wux_ref,
                  w1a_ref, w1b_ref, b1_ref, w2_ref, b2_ref, w3_ref, b3_ref,
                  out_ref):
    """SAGE conv (max aggregation) + global max/mean pool + MLP head + sigmoid.

    x_ref    : [N, D]   bf16  node embeddings
    adj_ref  : [N, N]   bf16  adj[i, j] = 1 iff edge j -> i (self-loops forced)
    mask_ref : [B, N]   bf16  mask[b, n] = 1 iff node n belongs to graph b
    wl_ref   : [D, H]   bf16  SAGE message Linear (in x out); bl_ref: [1, H] f32
    wua_ref  : [H, D]   bf16  SAGE update Linear rows for `aggr`   (no bias)
    wux_ref  : [D, D]   bf16  SAGE update Linear rows for `x`      (no bias)
    w1a_ref  : [D, 128] bf16  lin1 rows for gmp;  w1b_ref: [D, 128] bf16 rows for gap
    b1_ref   : [1, 128] f32
    w2_ref   : [128,64] bf16; b2_ref: [1, 64] f32
    w3_ref   : [1, 64]  f32   lin3 weight stored as a row (VPU reduce); b3: [1,1] f32
    out_ref  : [B, 1]   f32
    """
    n, d = x_ref.shape
    b = mask_ref.shape[0]
    h = wl_ref.shape[1]
    n_chunks = n // CHUNK

    x = x_ref[...]                                                   # bf16 [N, D]

    # ---- SAGE conv1: message = ReLU(x_j @ W_lin + b_lin), max aggregation ----
    # Single hoisted MXU matmul for all messages; the chunk loop below is pure
    # VPU/XLU select + running max (never materializes the [N, N, H] broadcast).
    msg = jnp.maximum(
        jnp.dot(x, wl_ref[...], preferred_element_type=jnp.float32)
        + bl_ref[...],
        0.0)                                                         # f32 [N, H]

    aggr = jnp.full((n, h), NEG, jnp.float32)
    for c in range(n_chunks):                       # tiny static trip count
        j0 = c * CHUNK
        msg_c = msg[j0:j0 + CHUNK, :]                                # f32 [C, H]
        adj_c = adj_ref[:, j0:j0 + CHUNK]                            # bf16 [N, C]
        cand = jnp.where(adj_c[:, :, None] > 0.0, msg_c[None, :, :], NEG)
        aggr = jnp.maximum(aggr, jnp.max(cand, axis=1))              # f32 [N, H]

    # update: ReLU(cat([aggr, x]) @ W_upd) as two K=128 dots (no lane concat).
    # The outer F.relu in forward is a no-op after this ReLU.
    feat = jnp.maximum(
        jnp.dot(aggr.astype(BF16), wua_ref[...],
                preferred_element_type=jnp.float32)
        + jnp.dot(x, wux_ref[...], preferred_element_type=jnp.float32),
        0.0)                                                         # f32 [N, D]
    feat_bf = feat.astype(BF16)

    # ---- global pooling (per graph) ----
    # global max pool: chunked running max over node tiles (VPU/XLU only)
    gmp = jnp.full((b, d), NEG, jnp.float32)
    for c in range(n_chunks):
        j0 = c * CHUNK
        f_c = feat[j0:j0 + CHUNK, :]                                 # f32 [C, D]
        m_c = mask_ref[:, j0:j0 + CHUNK]                             # bf16 [B, C]
        cand = jnp.where(m_c[:, :, None] > 0.0, f_c[None, :, :], NEG)
        gmp = jnp.maximum(gmp, jnp.max(cand, axis=1))                # f32 [B, D]

    # global mean pool: one MXU dot + per-graph scale; counts reduced from the
    # mask in-kernel (no extra invn input / DMA).
    counts = jnp.sum(mask_ref[...].astype(jnp.float32), axis=-1, keepdims=True)
    invn = 1.0 / jnp.maximum(counts, 1.0)                            # f32 [B, 1]
    gap = (jnp.dot(mask_ref[...], feat_bf,
                   preferred_element_type=jnp.float32) * invn)       # f32 [B, D]

    # ---- MLP head ----
    hdn = jnp.maximum(
        jnp.dot(gmp.astype(BF16), w1a_ref[...],
                preferred_element_type=jnp.float32)
        + jnp.dot(gap.astype(BF16), w1b_ref[...],
                  preferred_element_type=jnp.float32)
        + b1_ref[...],
        0.0)                                                         # f32 [B, 128]
    hdn = jnp.maximum(
        jnp.dot(hdn.astype(BF16), w2_ref[...],
                preferred_element_type=jnp.float32)
        + b2_ref[...],
        0.0)                                                         # f32 [B, 64]
    # dropout(p=0.5) is identity in eval mode.
    # lin3 has a single output column: VPU lane reduce instead of an MXU pass.
    logit = jnp.sum(hdn * w3_ref[...], axis=-1, keepdims=True) + b3_ref[...]
    # numerically stable sigmoid via tanh (EUP), no inf intermediate
    out_ref[...] = 0.5 * (jnp.tanh(0.5 * logit) + 1.0)               # [B, 1]


# ------------------------------ glue / wrapper ----------------------------- #

def build_adjacency(edge_index, num_nodes):
    """Dense adjacency: adj[i, j] = 1 iff edge j -> i.  remove_self_loops +
    add_self_loops  ==>  force the diagonal to 1 (also for padded nodes)."""
    src, dst = edge_index[0], edge_index[1]
    adj = jnp.zeros((num_nodes, num_nodes), jnp.float32).at[dst, src].set(1.0)
    eye = jnp.eye(num_nodes, dtype=jnp.float32)
    return adj * (1.0 - eye) + eye


def init_params(key, num_items, embedding_dim=128, hidden=128):
    ks = jax.random.split(key, 8)
    s = 0.1
    D, H = embedding_dim, hidden
    return dict(
        embedding=jax.random.normal(ks[0], (num_items, D), jnp.float32) * s,
        w_lin=jax.random.normal(ks[1], (D, H), jnp.float32) * s,     # lin (in x out)
        b_lin=jax.random.normal(ks[2], (1, H), jnp.float32) * s,
        w_upd=jax.random.normal(ks[3], (H + D, D), jnp.float32) * s,  # rows [aggr | x]
        w1=jax.random.normal(ks[4], (2 * D, 128), jnp.float32) * s,   # rows [gmp | gap]
        b1=jnp.zeros((1, 128), jnp.float32),
        w2=jax.random.normal(ks[5], (128, 64), jnp.float32) * s,
        b2=jnp.zeros((1, 64), jnp.float32),
        w3=jax.random.normal(ks[6], (1, 64), jnp.float32) * s,        # lin3 as a row
        b3=jnp.zeros((1, 1), jnp.float32),
    )


def recommender_forward(params, x_idx, edge_index, batch, num_graphs):
    # embedding lookup + squeeze(1): plain-JAX gather glue
    # TODO(synk): at real N, gather inside the kernel via PrefetchScalarGridSpec.
    emb = params["embedding"][x_idx[:, 0]].astype(BF16)              # bf16 [N, D]
    n, d = emb.shape
    h = params["w_lin"].shape[1]

    # pad node count up to a multiple of CHUNK (padded nodes: zero features,
    # self-loop only, graph id == num_graphs so every pooling mask excludes them)
    n_pad = ((n + CHUNK - 1) // CHUNK) * CHUNK
    if n_pad != n:
        emb = jnp.pad(emb, ((0, n_pad - n), (0, 0)))
        batch = jnp.pad(batch, (0, n_pad - n), constant_values=num_graphs)

    adj = build_adjacency(edge_index, n_pad).astype(BF16)            # bf16 [Np, Np]
    mask = (batch[None, :] == jnp.arange(num_graphs)[:, None]).astype(BF16)

    out = pl.pallas_call(
        _fused_kernel,
        out_shape=jax.ShapeDtypeStruct((num_graphs, 1), jnp.float32),
        in_specs=[VMEM_SPEC] * 14,
        out_specs=VMEM_SPEC,
    )(emb, adj, mask,
      params["w_lin"].astype(BF16), params["b_lin"],
      params["w_upd"][:h].astype(BF16), params["w_upd"][h:].astype(BF16),
      params["w1"][:d].astype(BF16), params["w1"][d:].astype(BF16), params["b1"],
      params["w2"].astype(BF16), params["b2"],
      params["w3"], params["b3"])

    return out[:, 0]                                                 # [B]


def reference_forward(params, x_idx, edge_index, batch, num_graphs):
    """Pure-JAX reference (same math + same bf16 operand casts, no Pallas)."""
    emb = params["embedding"][x_idx[:, 0]].astype(BF16)
    n, d = emb.shape
    h = params["w_lin"].shape[1]
    adj = build_adjacency(edge_index, n)
    msg = jax.nn.relu(jnp.dot(emb, params["w_lin"].astype(BF16),
                              preferred_element_type=jnp.float32) + params["b_lin"])
    aggr = jnp.max(jnp.where(adj[:, :, None] > 0, msg[None], NEG), axis=1)
    feat = jax.nn.relu(
        jnp.dot(aggr.astype(BF16), params["w_upd"][:h].astype(BF16),
                preferred_element_type=jnp.float32)
        + jnp.dot(emb, params["w_upd"][h:].astype(BF16),
                  preferred_element_type=jnp.float32))
    mask = (batch[None, :] == jnp.arange(num_graphs)[:, None]).astype(jnp.float32)
    gmp = jnp.max(jnp.where(mask[:, :, None] > 0, feat[None], NEG), axis=1)
    gap = (jnp.dot(mask.astype(BF16), feat.astype(BF16),
                   preferred_element_type=jnp.float32)
           / jnp.maximum(jnp.sum(mask, axis=1, keepdims=True), 1.0))
    hd = jax.nn.relu(
        jnp.dot(gmp.astype(BF16), params["w1"][:d].astype(BF16),
                preferred_element_type=jnp.float32)
        + jnp.dot(gap.astype(BF16), params["w1"][d:].astype(BF16),
                  preferred_element_type=jnp.float32)
        + params["b1"])
    hd = jax.nn.relu(jnp.dot(hd.astype(BF16), params["w2"].astype(BF16),
                             preferred_element_type=jnp.float32) + params["b2"])
    logit = jnp.sum(hd * params["w3"], axis=-1, keepdims=True) + params["b3"]
    return jax.nn.sigmoid(logit)[:, 0]


if __name__ == "__main__":
    key = jax.random.PRNGKey(0)
    k_param, k_items, k_src, k_dst = jax.random.split(key, 4)

    num_items = 50
    embedding_dim = 128
    num_graphs = 2
    nodes_per_graph = 8
    n_nodes = num_graphs * nodes_per_graph                           # 16
    edges_per_graph = 12

    params = init_params(k_param, num_items, embedding_dim)

    # data.x: item index per node, shape [N, 1]
    x_idx = jax.random.randint(k_items, (n_nodes, 1), 0, num_items, jnp.int32)

    # data.edge_index: [2, E], edges kept within each graph
    srcs, dsts = [], []
    for g in range(num_graphs):
        ks, kd = jax.random.split(jax.random.fold_in(k_src, g))
        lo = g * nodes_per_graph
        srcs.append(jax.random.randint(ks, (edges_per_graph,), lo, lo + nodes_per_graph))
        dsts.append(jax.random.randint(kd, (edges_per_graph,), lo, lo + nodes_per_graph))
    edge_index = jnp.stack([jnp.concatenate(srcs), jnp.concatenate(dsts)]).astype(jnp.int32)

    # data.batch: graph id per node
    batch = jnp.repeat(jnp.arange(num_graphs, dtype=jnp.int32), nodes_per_graph)

    out = recommender_forward(params, x_idx, edge_index, batch, num_graphs)
    out = jax.block_until_ready(out)

    ref = reference_forward(params, x_idx, edge_index, batch, num_graphs)
    assert out.shape == (num_graphs,)
    assert bool(jnp.all(jnp.isfinite(out))), out
    # tolerance covers MXU-vs-XLA accumulation-order differences (same bf16 operands)
    assert jnp.allclose(out, ref, atol=2e-3, rtol=2e-3), (out, ref)

    print("KERNEL_OK")
</pallas_src>

<mosaic_0001>
module attributes {stable_mosaic.version = 11 : i64} {
  func.func @_fused_kernel(%arg0: memref<16x128xbf16, #tpu.memory_space<vmem>>, %arg1: memref<16x16xbf16, #tpu.memory_space<vmem>>, %arg2: memref<2x16xbf16, #tpu.memory_space<vmem>>, %arg3: memref<128x128xbf16, #tpu.memory_space<vmem>>, %arg4: memref<1x128xf32, #tpu.memory_space<vmem>>, %arg5: memref<128x128xbf16, #tpu.memory_space<vmem>>, %arg6: memref<128x128xbf16, #tpu.memory_space<vmem>>, %arg7: memref<128x128xbf16, #tpu.memory_space<vmem>>, %arg8: memref<128x128xbf16, #tpu.memory_space<vmem>>, %arg9: memref<1x128xf32, #tpu.memory_space<vmem>>, %arg10: memref<128x64xbf16, #tpu.memory_space<vmem>>, %arg11: memref<1x64xf32, #tpu.memory_space<vmem>>, %arg12: memref<1x64xf32, #tpu.memory_space<vmem>>, %arg13: memref<1x1xf32, #tpu.memory_space<vmem>>, %arg14: memref<2x1xf32, #tpu.memory_space<vmem>>) attributes {dimension_semantics = [], scalar_prefetch = 0 : i64, scratch_operands = 0 : i64, tpu.core_type = #tpu.core_type<tc>} {
    %c0 = arith.constant 0 : index
    %c0_0 = arith.constant 0 : index
    %0 = vector.load %arg0[%c0, %c0_0] : memref<16x128xbf16, #tpu.memory_space<vmem>>, vector<16x128xbf16>
    %c0_1 = arith.constant 0 : index
    %c0_2 = arith.constant 0 : index
    %1 = vector.load %arg3[%c0_1, %c0_2] : memref<128x128xbf16, #tpu.memory_space<vmem>>, vector<128x128xbf16>
    %cst = arith.constant dense<0.000000e+00> : vector<16x128xf32>
    %2 = tpu.matmul %0, %1, %cst {dimension_numbers = #tpu.dot_dimension_numbers<[1], [0], [0], [1], [0, 0, 1, 1], [], []>} : vector<16x128xbf16>, vector<128x128xbf16>, vector<16x128xf32> -> vector<16x128xf32>
    %c0_3 = arith.constant 0 : index
    %c0_4 = arith.constant 0 : index
    %3 = vector.load %arg4[%c0_3, %c0_4] : memref<1x128xf32, #tpu.memory_space<vmem>>, vector<1x128xf32>
    %4 = vector.broadcast %3 : vector<1x128xf32> to vector<16x128xf32>
    %5 = arith.addf %2, %4 : vector<16x128xf32>
    %cst_5 = arith.constant 0.000000e+00 : f32
    %6 = vector.broadcast %cst_5 : f32 to vector<16x128xf32>
    %7 = arith.maximumf %5, %6 : vector<16x128xf32>
    %cst_6 = arith.constant -1.000000e+30 : f32
    %8 = vector.broadcast %cst_6 : f32 to vector<16x128xf32>
    %9 = vector.extract_strided_slice %7 {offsets = [0, 0], sizes = [8, 128], strides = [1, 1]} : vector<16x128xf32> to vector<8x128xf32>
    %c0_7 = arith.constant 0 : index
    %c0_8 = arith.constant 0 : index
    %10 = vector.load %arg1[%c0_7, %c0_8] : memref<16x16xbf16, #tpu.memory_space<vmem>>, vector<16x8xbf16>
    %11 = vector.shape_cast %10 : vector<16x8xbf16> to vector<16x8x1xbf16>
    %cst_9 = arith.constant 0.000000e+00 : bf16
    %12 = vector.broadcast %cst_9 : bf16 to vector<16x8x1xbf16>
    %13 = arith.cmpf ogt, %11, %12 : vector<16x8x1xbf16>
    %14 = vector.shape_cast %9 : vector<8x128xf32> to vector<1x8x128xf32>
    %cst_10 = arith.constant -1.000000e+30 : f32
    %15 = vector.shape_cast %13 : vector<16x8x1xi1> to vector<16x8x1xi1>
    %16 = vector.broadcast %15 : vector<16x8x1xi1> to vector<16x8x128xi1>
    %17 = vector.shape_cast %14 : vector<1x8x128xf32> to vector<1x8x128xf32>
    %18 = vector.broadcast %17 : vector<1x8x128xf32> to vector<16x8x128xf32>
    %19 = vector.broadcast %cst_10 : f32 to vector<16x8x128xf32>
    %20 = arith.select %16, %18, %19 : vector<16x8x128xi1>, vector<16x8x128xf32>
    %cst_11 = arith.constant dense<0xFF800000> : vector<16x128xf32>
    %21 = vector.multi_reduction <maximumf>, %20, %cst_11 [1] : vector<16x8x128xf32> to vector<16x128xf32>
    %22 = arith.maximumf %8, %21 : vector<16x128xf32>
    %23 = vector.extract_strided_slice %7 {offsets = [8, 0], sizes = [8, 128], strides = [1, 1]} : vector<16x128xf32> to vector<8x128xf32>
    %c0_12 = arith.constant 0 : index
    %c8 = arith.constant 8 : index
    %24 = vector.load %arg1[%c0_12, %c8] : memref<16x16xbf16, #tpu.memory_space<vmem>>, vector<16x8xbf16>
    %25 = vector.shape_cast %24 : vector<16x8xbf16> to vector<16x8x1xbf16>
    %cst_13 = arith.constant 0.000000e+00 : bf16
    %26 = vector.broadcast %cst_13 : bf16 to vector<16x8x1xbf16>
    %27 = arith.cmpf ogt, %25, %26 : vector<16x8x1xbf16>
    %28 = vector.shape_cast %23 : vector<8x128xf32> to vector<1x8x128xf32>
    %cst_14 = arith.constant -1.000000e+30 : f32
    %29 = vector.shape_cast %27 : vector<16x8x1xi1> to vector<16x8x1xi1>
    %30 = vector.broadcast %29 : vector<16x8x1xi1> to vector<16x8x128xi1>
    %31 = vector.shape_cast %28 : vector<1x8x128xf32> to vector<1x8x128xf32>
    %32 = vector.broadcast %31 : vector<1x8x128xf32> to vector<16x8x128xf32>
    %33 = vector.broadcast %cst_14 : f32 to vector<16x8x128xf32>
    %34 = arith.select %30, %32, %33 : vector<16x8x128xi1>, vector<16x8x128xf32>
    %cst_15 = arith.constant dense<0xFF800000> : vector<16x128xf32>
    %35 = vector.multi_reduction <maximumf>, %34, %cst_15 [1] : vector<16x8x128xf32> to vector<16x128xf32>
    %36 = arith.maximumf %22, %35 : vector<16x128xf32>
    %37 = arith.truncf %36 : vector<16x128xf32> to vector<16x128xbf16>
    %c0_16 = arith.constant 0 : index
    %c0_17 = arith.constant 0 : index
    %38 = vector.load %arg5[%c0_16, %c0_17] : memref<128x128xbf16, #tpu.memory_space<vmem>>, vector<128x128xbf16>
    %cst_18 = arith.constant dense<0.000000e+00> : vector<16x128xf32>
    %39 = tpu.matmul %37, %38, %cst_18 {dimension_numbers = #tpu.dot_dimension_numbers<[1], [0], [0], [1], [0, 0, 1, 1], [], []>} : vector<16x128xbf16>, vector<128x128xbf16>, vector<16x128xf32> -> vector<16x128xf32>
    %c0_19 = arith.constant 0 : index
    %c0_20 = arith.constant 0 : index
    %40 = vector.load %arg6[%c0_19, %c0_20] : memref<128x128xbf16, #tpu.memory_space<vmem>>, vector<128x128xbf16>
    %cst_21 = arith.constant dense<0.000000e+00> : vector<16x128xf32>
    %41 = tpu.matmul %0, %40, %cst_21 {dimension_numbers = #tpu.dot_dimension_numbers<[1], [0], [0], [1], [0, 0, 1, 1], [], []>} : vector<16x128xbf16>, vector<128x128xbf16>, vector<16x128xf32> -> vector<16x128xf32>
    %42 = arith.addf %39, %41 : vector<16x128xf32>
    %cst_22 = arith.constant 0.000000e+00 : f32
    %43 = vector.broadcast %cst_22 : f32 to vector<16x128xf32>
    %44 = arith.maximumf %42, %43 : vector<16x128xf32>
    %45 = arith.truncf %44 : vector<16x128xf32> to vector<16x128xbf16>
    %cst_23 = arith.constant -1.000000e+30 : f32
    %46 = vector.broadcast %cst_23 : f32 to vector<2x128xf32>
    %47 = vector.extract_strided_slice %44 {offsets = [0, 0], sizes = [8, 128], strides = [1, 1]} : vector<16x128xf32> to vector<8x128xf32>
    %c0_24 = arith.constant 0 : index
    %c0_25 = arith.constant 0 : index
    %48 = vector.load %arg2[%c0_24, %c0_25] : memref<2x16xbf16, #tpu.memory_space<vmem>>, vector<2x8xbf16>
    %49 = vector.shape_cast %48 : vector<2x8xbf16> to vector<2x8x1xbf16>
    %cst_26 = arith.constant 0.000000e+00 : bf16
    %50 = vector.broadcast %cst_26 : bf16 to vector<2x8x1xbf16>
    %51 = arith.cmpf ogt, %49, %50 : vector<2x8x1xbf16>
    %52 = vector.shape_cast %47 : vector<8x128xf32> to vector<1x8x128xf32>
    %cst_27 = arith.constant -1.000000e+30 : f32
    %53 = vector.shape_cast %51 : vector<2x8x1xi1> to vector<2x8x1xi1>
    %54 = vector.broadcast %53 : vector<2x8x1xi1> to vector<2x8x128xi1>
    %55 = vector.shape_cast %52 : vector<1x8x128xf32> to vector<1x8x128xf32>
    %56 = vector.broadcast %55 : vector<1x8x128xf32> to vector<2x8x128xf32>
    %57 = vector.broadcast %cst_27 : f32 to vector<2x8x128xf32>
    %58 = arith.select %54, %56, %57 : vector<2x8x128xi1>, vector<2x8x128xf32>
    %cst_28 = arith.constant dense<0xFF800000> : vector<2x128xf32>
    %59 = vector.multi_reduction <maximumf>, %58, %cst_28 [1] : vector<2x8x128xf32> to vector<2x128xf32>
    %60 = arith.maximumf %46, %59 : vector<2x128xf32>
    %61 = vector.extract_strided_slice %44 {offsets = [8, 0], sizes = [8, 128], strides = [1, 1]} : vector<16x128xf32> to vector<8x128xf32>
    %c0_29 = arith.constant 0 : index
    %c8_30 = arith.constant 8 : index
    %62 = vector.load %arg2[%c0_29, %c8_30] : memref<2x16xbf16, #tpu.memory_space<vmem>>, vector<2x8xbf16>
    %63 = vector.shape_cast %62 : vector<2x8xbf16> to vector<2x8x1xbf16>
    %cst_31 = arith.constant 0.000000e+00 : bf16
    %64 = vector.broadcast %cst_31 : bf16 to vector<2x8x1xbf16>
    %65 = arith.cmpf ogt, %63, %64 : vector<2x8x1xbf16>
    %66 = vector.shape_cast %61 : vector<8x128xf32> to vector<1x8x128xf32>
    %cst_32 = arith.constant -1.000000e+30 : f32
    %67 = vector.shape_cast %65 : vector<2x8x1xi1> to vector<2x8x1xi1>
    %68 = vector.broadcast %67 : vector<2x8x1xi1> to vector<2x8x128xi1>
    %69 = vector.shape_cast %66 : vector<1x8x128xf32> to vector<1x8x128xf32>
    %70 = vector.broadcast %69 : vector<1x8x128xf32> to vector<2x8x128xf32>
    %71 = vector.broadcast %cst_32 : f32 to vector<2x8x128xf32>
    %72 = arith.select %68, %70, %71 : vector<2x8x128xi1>, vector<2x8x128xf32>
    %cst_33 = arith.constant dense<0xFF800000> : vector<2x128xf32>
    %73 = vector.multi_reduction <maximumf>, %72, %cst_33 [1] : vector<2x8x128xf32> to vector<2x128xf32>
    %74 = arith.maximumf %60, %73 : vector<2x128xf32>
    %c0_34 = arith.constant 0 : index
    %c0_35 = arith.constant 0 : index
    %75 = vector.load %arg2[%c0_34, %c0_35] : memref<2x16xbf16, #tpu.memory_space<vmem>>, vector<2x16xbf16>
    %76 = arith.extf %75 : vector<2x16xbf16> to vector<2x16xf32>
    %cst_36 = arith.constant dense<0.000000e+00> : vector<2xf32>
    %77 = vector.multi_reduction <add>, %76, %cst_36 [1] : vector<2x16xf32> to vector<2xf32>
    %78 = vector.shape_cast %77 : vector<2xf32> to vector<2x1xf32>
    %cst_37 = arith.constant 1.000000e+00 : f32
    %79 = vector.broadcast %cst_37 : f32 to vector<2x1xf32>
    %80 = arith.maximumf %78, %79 : vector<2x1xf32>
    %cst_38 = arith.constant 1.000000e+00 : f32
    %81 = vector.broadcast %cst_38 : f32 to vector<2x1xf32>
    %82 = arith.divf %81, %80 : vector<2x1xf32>
    %c0_39 = arith.constant 0 : index
    %c0_40 = arith.constant 0 : index
    %83 = vector.load %arg2[%c0_39, %c0_40] : memref<2x16xbf16, #tpu.memory_space<vmem>>, vector<2x16xbf16>
    %cst_41 = arith.constant dense<0.000000e+00> : vector<2x128xf32>
    %84 = tpu.matmul %83, %45, %cst_41 {dimension_numbers = #tpu.dot_dimension_numbers<[1], [0], [0], [1], [0, 0, 1, 1], [], []>} : vector<2x16xbf16>, vector<16x128xbf16>, vector<2x128xf32> -> vector<2x128xf32>
    %85 = vector.broadcast %82 : vector<2x1xf32> to vector<2x128xf32>
    %86 = arith.mulf %84, %85 : vector<2x128xf32>
    %87 = arith.truncf %74 : vector<2x128xf32> to vector<2x128xbf16>
    %c0_42 = arith.constant 0 : index
    %c0_43 = arith.constant 0 : index
    %88 = vector.load %arg7[%c0_42, %c0_43] : memref<128x128xbf16, #tpu.memory_space<vmem>>, vector<128x128xbf16>
    %cst_44 = arith.constant dense<0.000000e+00> : vector<2x128xf32>
    %89 = tpu.matmul %87, %88, %cst_44 {dimension_numbers = #tpu.dot_dimension_numbers<[1], [0], [0], [1], [0, 0, 1, 1], [], []>} : vector<2x128xbf16>, vector<128x128xbf16>, vector<2x128xf32> -> vector<2x128xf32>
    %90 = arith.truncf %86 : vector<2x128xf32> to vector<2x128xbf16>
    %c0_45 = arith.constant 0 : index
    %c0_46 = arith.constant 0 : index
    %91 = vector.load %arg8[%c0_45, %c0_46] : memref<128x128xbf16, #tpu.memory_space<vmem>>, vector<128x128xbf16>
    %cst_47 = arith.constant dense<0.000000e+00> : vector<2x128xf32>
    %92 = tpu.matmul %90, %91, %cst_47 {dimension_numbers = #tpu.dot_dimension_numbers<[1], [0], [0], [1], [0, 0, 1, 1], [], []>} : vector<2x128xbf16>, vector<128x128xbf16>, vector<2x128xf32> -> vector<2x128xf32>
    %93 = arith.addf %89, %92 : vector<2x128xf32>
    %c0_48 = arith.constant 0 : index
    %c0_49 = arith.constant 0 : index
    %94 = vector.load %arg9[%c0_48, %c0_49] : memref<1x128xf32, #tpu.memory_space<vmem>>, vector<1x128xf32>
    %95 = vector.broadcast %94 : vector<1x128xf32> to vector<2x128xf32>
    %96 = arith.addf %93, %95 : vector<2x128xf32>
    %cst_50 = arith.constant 0.000000e+00 : f32
    %97 = vector.broadcast %cst_50 : f32 to vector<2x128xf32>
    %98 = arith.maximumf %96, %97 : vector<2x128xf32>
    %99 = arith.truncf %98 : vector<2x128xf32> to vector<2x128xbf16>
    %c0_51 = arith.constant 0 : index
    %c0_52 = arith.constant 0 : index
    %100 = vector.load %arg10[%c0_51, %c0_52] : memref<128x64xbf16, #tpu.memory_space<vmem>>, vector<128x64xbf16>
    %cst_53 = arith.constant dense<0.000000e+00> : vector<2x64xf32>
    %101 = tpu.matmul %99, %100, %cst_53 {dimension_numbers = #tpu.dot_dimension_numbers<[1], [0], [0], [1], [0, 0, 1, 1], [], []>} : vector<2x128xbf16>, vector<128x64xbf16>, vector<2x64xf32> -> vector<2x64xf32>
    %c0_54 = arith.constant 0 : index
    %c0_55 = arith.constant 0 : index
    %102 = vector.load %arg11[%c0_54, %c0_55] : memref<1x64xf32, #tpu.memory_space<vmem>>, vector<1x64xf32>
    %103 = vector.broadcast %102 : vector<1x64xf32> to vector<2x64xf32>
    %104 = arith.addf %101, %103 : vector<2x64xf32>
    %cst_56 = arith.constant 0.000000e+00 : f32
    %105 = vector.broadcast %cst_56 : f32 to vector<2x64xf32>
    %106 = arith.maximumf %104, %105 : vector<2x64xf32>
    %c0_57 = arith.constant 0 : index
    %c0_58 = arith.constant 0 : index
    %107 = vector.load %arg12[%c0_57, %c0_58] : memref<1x64xf32, #tpu.memory_space<vmem>>, vector<1x64xf32>
    %108 = vector.broadcast %107 : vector<1x64xf32> to vector<2x64xf32>
    %109 = arith.mulf %106, %108 : vector<2x64xf32>
    %cst_59 = arith.constant dense<0.000000e+00> : vector<2xf32>
    %110 = vector.multi_reduction <add>, %109, %cst_59 [1] : vector<2x64xf32> to vector<2xf32>
    %111 = vector.shape_cast %110 : vector<2xf32> to vector<2x1xf32>
    %c0_60 = arith.constant 0 : index
    %c0_61 = arith.constant 0 : index
    %112 = vector.load %arg13[%c0_60, %c0_61] : memref<1x1xf32, #tpu.memory_space<vmem>>, vector<1x1xf32>
    %113 = vector.broadcast %112 : vector<1x1xf32> to vector<2x1xf32>
    %114 = arith.addf %111, %113 : vector<2x1xf32>
    %cst_62 = arith.constant 5.000000e-01 : f32
    %115 = vector.broadcast %cst_62 : f32 to vector<2x1xf32>
    %116 = arith.mulf %115, %114 : vector<2x1xf32>
    %117 = math.tanh %116 : vector<2x1xf32>
    %cst_63 = arith.constant 1.000000e+00 : f32
    %118 = vector.broadcast %cst_63 : f32 to vector<2x1xf32>
    %119 = arith.addf %117, %118 : vector<2x1xf32>
    %cst_64 = arith.constant 5.000000e-01 : f32
    %120 = vector.broadcast %cst_64 : f32 to vector<2x1xf32>
    %121 = arith.mulf %120, %119 : vector<2x1xf32>
    %c0_65 = arith.constant 0 : index
    %c0_66 = arith.constant 0 : index
    %122 = vector.load %arg14[%c0_65, %c0_66] : memref<2x1xf32, #tpu.memory_space<vmem>>, vector<2x1xf32>
    tpu.vector_store %arg14[%c0_65, %c0_66], %121 {strides = array<i32>} : memref<2x1xf32, #tpu.memory_space<vmem>>, vector<2x1xf32>,
    return
  }
}

</mosaic_0001>

<llo_original>
// kernel: tpu_custom_call.1
$region0: #{tpu_custom_call.1}
  #allocation0 [shape = 'u32[]', space=smem, size = 0x4, offset = 0x4, fixed_abs, tag = 'smem constant byte address 0x4 - core index']
  #allocation1 [shape = 'u32[144,128]{1,0:T(1,128)}', space=vmem, size = 0x12000, scoped, tag = 'internal scratch']
  #allocation2 [shape = 'f32[1,1]{1,0:T(1,128)S(1)}', space=vmem, size = 0x200, scoped, tag = 'scoped memory for tpu_custom_call.1']
  %s0 = inlined_call_operand.hbm [shape: bf16[16,128], index: 0, kind: input, shape index: {}]
  %s1 = inlined_call_operand.hbm [shape: bf16[16,16], index: 1, kind: input, shape index: {}]
  %s2 = inlined_call_operand.vmem [shape: bf16[2,16], index: 2, kind: input, shape index: {}]
  %s3 = inlined_call_operand.vmem [shape: bf16[128,128], index: 3, kind: input, shape index: {}]
  %s4 = inlined_call_operand.vmem [shape: f32[1,128], index: 4, kind: input, shape index: {}]
  %s5 = inlined_call_operand.hbm [shape: bf16[128,128], index: 5, kind: input, shape index: {}]
  %s6 = inlined_call_operand.hbm [shape: bf16[128,128], index: 6, kind: input, shape index: {}]
  %s7 = inlined_call_operand.hbm [shape: bf16[128,128], index: 7, kind: input, shape index: {}]
  %s8 = inlined_call_operand.vmem [shape: bf16[128,128], index: 8, kind: input, shape index: {}]
  %s9 = inlined_call_operand.vmem [shape: f32[1,128], index: 9, kind: input, shape index: {}]
  %s10 = inlined_call_operand.vmem [shape: bf16[128,64], index: 10, kind: input, shape index: {}]
  %s11 = inlined_call_operand.vmem [shape: f32[1,64], index: 11, kind: input, shape index: {}]
  %s12 = inlined_call_operand.vmem [shape: f32[1,64], index: 12, kind: input, shape index: {}]
  %s13 = inlined_call_operand.<no memory space> [shape: f32[1,1], index: 13, kind: input, shape index: {}]
  %s14 = inlined_call_operand.vmem [shape: f32[2,1], index: 14, kind: output, shape index: {}]
  %s15 = sld [smem:[#allocation0]]
  $region86: #{tpu_custom_call.1} parent=0
    _
  %s17 = ssub.s32 1, %s15
  %s18 = scalar_select 0, %s17, %s15
  %v19 = vstv %s13
  %20 = vst [vmem:[#allocation2] sm:$0x1] %v19
  $region1: #{tpu_custom_call.1} parent=0
    #allocation3 [shape = 'u8[4096]{0}', space=vmem, size = 0x1000, scoped, tag = 'input window, operand 0, single buffered']
    #allocation4 [shape = 's32[1]{0}', space=sflag, size = 0x4, scoped, tag = 'scoped memory for tpu_custom_call.1']
    #allocation5 [shape = 'u8[4096]{0}', space=vmem, size = 0x1000, scoped, tag = 'input window, operand 1, single buffered']
    #allocation6 [shape = 's32[1]{0}', space=sflag, size = 0x4, scoped, tag = 'scoped memory for tpu_custom_call.1']
    #allocation7 [shape = 'u8[32768]{0}', space=vmem, size = 0x8000, scoped, tag = 'input window, operand 5, single buffered']
    #allocation8 [shape = 'u8[32768]{0}', space=vmem, size = 0x8000, scoped, tag = 'input window, operand 6, single buffered']
    #allocation9 [shape = 's32[1]{0}', space=sflag, size = 0x4, scoped, tag = 'scoped memory for tpu_custom_call.1']
    #allocation10 [shape = 'u8[32768]{0}', space=vmem, size = 0x8000, scoped, tag = 'input window, operand 7, single buffered']
    %21 = vsyncpa [#allocation4], 0
    %22 = vsyncpa [#allocation6], 0
    %23 = vsyncpa [#allocation9], 0
    // Predicated region
    $region2: #{tpu_custom_call.1} parent=1 // pred_check
      _
    $region3: #{tpu_custom_call.1} parent=1 // pred_check_branch
      %25 = sbr.rel (0) target = $region5
    $region4: #{tpu_custom_call.1} parent=1 // pred_region
      %s27 = ssub.s32 128, 128
      %28 = vsyncadd [#allocation4], %s27
      %s29 = sshll.u32 [#allocation3], 4
      %s30 = int_to_ptr.vmem [resolvable:$true] %s29
      %35 = dma.hbm_to_vmem [thread:$0]  %s0, 128, %s30, [#allocation4], 64, 64, 4
    $region5: #{tpu_custom_call.1} parent=1 // pred_fallthru
      _
    // Predicated region
    $region6: #{tpu_custom_call.1} parent=1 // pred_check
      _
    $region7: #{tpu_custom_call.1} parent=1 // pred_check_branch
      %37 = sbr.rel (0) target = $region9
    $region8: #{tpu_custom_call.1} parent=1 // pred_region
      %s39 = ssub.s32 128, 128
      %40 = vsyncadd [#allocation6], %s39
      %s41 = sshll.u32 [#allocation5], 4
      %s42 = int_to_ptr.vmem [resolvable:$true] %s41
      %47 = dma.hbm_to_vmem [thread:$0]  %s1, 128, %s42, [#allocation6], 64, 64, 4
    $region9: #{tpu_custom_call.1} parent=1 // pred_fallthru
      _
    // Predicated region
    $region10: #{tpu_custom_call.1} parent=1 // pred_check
      _
    $region11: #{tpu_custom_call.1} parent=1 // pred_check_branch
      %49 = sbr.rel (0) target = $region13
    $region12: #{tpu_custom_call.1} parent=1 // pred_region
      _
    $region13: #{tpu_custom_call.1} parent=1 // pred_fallthru
      _
    // Predicated region
    $region14: #{tpu_custom_call.1} parent=1 // pred_check
      _
    $region15: #{tpu_custom_call.1} parent=1 // pred_check_branch
      %51 = sbr.rel (0) target = $region17
    $region16: #{tpu_custom_call.1} parent=1 // pred_region
      _
    $region17: #{tpu_custom_call.1} parent=1 // pred_fallthru
      _
    // Predicated region
    $region18: #{tpu_custom_call.1} parent=1 // pred_check
      _
    $region19: #{tpu_custom_call.1} parent=1 // pred_check_branch
      %53 = sbr.rel (0) target = $region21
    $region20: #{tpu_custom_call.1} parent=1 // pred_region
      _
    $region21: #{tpu_custom_call.1} parent=1 // pred_fallthru
      _
    // Predicated region
    $region22: #{tpu_custom_call.1} parent=1 // pred_check
      _
    $region23: #{tpu_custom_call.1} parent=1 // pred_check_branch
      %55 = sbr.rel (0) target = $region25
    $region24: #{tpu_custom_call.1} parent=1 // pred_region
      %s57 = ssub.s32 1024, 1024
      %58 = vsyncadd [#allocation6], %s57
      %s59 = sshll.u32 [#allocation7], 4
      %s60 = int_to_ptr.vmem [resolvable:$true] %s59
      %65 = dma.hbm_to_vmem [thread:$0]  %s5, 1024, %s60, [#allocation6], 64, 64, 4
    $region25: #{tpu_custom_call.1} parent=1 // pred_fallthru
      _
    // Predicated region
    $region26: #{tpu_custom_call.1} parent=1 // pred_check
      _
    $region27: #{tpu_custom_call.1} parent=1 // pred_check_branch
      %67 = sbr.rel (0) target = $region29
    $region28: #{tpu_custom_call.1} parent=1 // pred_region
      %s69 = ssub.s32 1024, 1024
      %70 = vsyncadd [#allocation9], %s69
      %s71 = sshll.u32 [#allocation8], 4
      %s72 = int_to_ptr.vmem [resolvable:$true] %s71
      %77 = dma.hbm_to_vmem [thread:$0]  %s6, 1024, %s72, [#allocation9], 64, 64, 4
    $region29: #{tpu_custom_call.1} parent=1 // pred_fallthru
      _
    // Predicated region
    $region30: #{tpu_custom_call.1} parent=1 // pred_check
      _
    $region31: #{tpu_custom_call.1} parent=1 // pred_check_branch
      %79 = sbr.rel (0) target = $region33
    $region32: #{tpu_custom_call.1} parent=1 // pred_region
      %s81 = ssub.s32 1024, 1024
      %82 = vsyncadd [#allocation9], %s81
      %s83 = sshll.u32 [#allocation10], 4
      %s84 = int_to_ptr.vmem [resolvable:$true] %s83
      %89 = dma.hbm_to_vmem [thread:$0]  %s7, 1024, %s84, [#allocation9], 64, 64, 4
    $region33: #{tpu_custom_call.1} parent=1 // pred_fallthru
      _
    // Predicated region
    $region34: #{tpu_custom_call.1} parent=1 // pred_check
      _
    $region35: #{tpu_custom_call.1} parent=1 // pred_check_branch
      %91 = sbr.rel (0) target = $region37
    $region36: #{tpu_custom_call.1} parent=1 // pred_region
      _
    $region37: #{tpu_custom_call.1} parent=1 // pred_fallthru
      _
    // Predicated region
    $region38: #{tpu_custom_call.1} parent=1 // pred_check
      _
    $region39: #{tpu_custom_call.1} parent=1 // pred_check_branch
      %93 = sbr.rel (0) target = $region41
    $region40: #{tpu_custom_call.1} parent=1 // pred_region
      _
    $region41: #{tpu_custom_call.1} parent=1 // pred_fallthru
      _
    // Predicated region
    $region42: #{tpu_custom_call.1} parent=1 // pred_check
      _
    $region43: #{tpu_custom_call.1} parent=1 // pred_check_branch
      %95 = sbr.rel (0) target = $region45
    $region44: #{tpu_custom_call.1} parent=1 // pred_region
      _
    $region45: #{tpu_custom_call.1} parent=1 // pred_fallthru
      _
    // Predicated region
    $region46: #{tpu_custom_call.1} parent=1 // pred_check
      _
    $region47: #{tpu_custom_call.1} parent=1 // pred_check_branch
      %97 = sbr.rel (0) target = $region49
    $region48: #{tpu_custom_call.1} parent=1 // pred_region
      _
    $region49: #{tpu_custom_call.1} parent=1 // pred_fallthru
      _
    // Predicated region
    $region50: #{tpu_custom_call.1} parent=1 // pred_check
      _
    $region51: #{tpu_custom_call.1} parent=1 // pred_check_branch
      %99 = sbr.rel (0) target = $region53
    $region52: #{tpu_custom_call.1} parent=1 // pred_region
      _
    $region53: #{tpu_custom_call.1} parent=1 // pred_fallthru
      _
    // Predicated region
    $region54: #{tpu_custom_call.1} parent=1 // pred_check
      _
    $region55: #{tpu_custom_call.1} parent=1 // pred_check_branch
      %101 = sbr.rel (0) target = $region57
    $region56: #{tpu_custom_call.1} parent=1 // pred_region
      _
    $region57: #{tpu_custom_call.1} parent=1 // pred_fallthru
      _
    // Predicated region
    $region58: #{tpu_custom_call.1} parent=1 // pred_check
      _
    $region59: #{tpu_custom_call.1} parent=1 // pred_check_branch
      %103 = sbr.rel (0) target = $region61
    $region60: #{tpu_custom_call.1} parent=1 // pred_region
      %104 = dma.done [#allocation4], 128
    $region61: #{tpu_custom_call.1} parent=1 // pred_fallthru
      _
    // Predicated region
    $region62: #{tpu_custom_call.1} parent=1 // pred_check
      _
    $region63: #{tpu_custom_call.1} parent=1 // pred_check_branch
      %106 = sbr.rel (0) target = $region65
    $region64: #{tpu_custom_call.1} parent=1 // pred_region
      %107 = dma.done [#allocation6], 128
    $region65: #{tpu_custom_call.1} parent=1 // pred_fallthru
      _
    // Predicated region
    $region66: #{tpu_custom_call.1} parent=1 // pred_check
      _
    $region67: #{tpu_custom_call.1} parent=1 // pred_check_branch
      %109 = sbr.rel (0) target = $region69
    $region68: #{tpu_custom_call.1} parent=1 // pred_region
      %110 = dma.done [#allocation6], 1024
    $region69: #{tpu_custom_call.1} parent=1 // pred_fallthru
      _
    // Predicated region
    $region70: #{tpu_custom_call.1} parent=1 // pred_check
      _
    $region71: #{tpu_custom_call.1} parent=1 // pred_check_branch
      %112 = sbr.rel (0) target = $region73
    $region72: #{tpu_custom_call.1} parent=1 // pred_region
      %113 = dma.done [#allocation9], 1024
    $region73: #{tpu_custom_call.1} parent=1 // pred_fallthru
      _
    // Predicated region
    $region74: #{tpu_custom_call.1} parent=1 // pred_check
      _
    $region75: #{tpu_custom_call.1} parent=1 // pred_check_branch
      %115 = sbr.rel (0) target = $region77
    $region76: #{tpu_custom_call.1} parent=1 // pred_region
      %116 = dma.done [#allocation9], 1024
    $region77: #{tpu_custom_call.1} parent=1 // pred_fallthru
      _
    %v120 = vld [vmem:[#allocation3] sm:$0xf]
    %v121 = vld [vmem:[#allocation3 + $0x4] sm:$0xf]
    %v122 = vld [vmem:[%s3] sm:$0xf]
    %v123 = vld [vmem:[%s3 + $0x4] sm:$0xf]
    %v124 = vld [vmem:[%s3 + $0x8] sm:$0xf]
    %v125 = vld [vmem:[%s3 + $0xc] sm:$0xf]
    %v126 = vld [vmem:[%s3 + $0x10] sm:$0xf]
    %v127 = vld [vmem:[%s3 + $0x14] sm:$0xf]
    %v128 = vld [vmem:[%s3 + $0x18] sm:$0xf]
    %v129 = vld [vmem:[%s3 + $0x1c] sm:$0xf]
    %v130 = vld [vmem:[%s3 + $0x20] sm:$0xf]
    %v131 = vld [vmem:[%s3 + $0x24] sm:$0xf]
    %v132 = vld [vmem:[%s3 + $0x28] sm:$0xf]
    %v133 = vld [vmem:[%s3 + $0x2c] sm:$0xf]
    %v134 = vld [vmem:[%s3 + $0x30] sm:$0xf]
    %v135 = vld [vmem:[%s3 + $0x34] sm:$0xf]
    %v136 = vld [vmem:[%s3 + $0x38] sm:$0xf]
    %v137 = vld [vmem:[%s3 + $0x3c] sm:$0xf]
    %v138 = vld [vmem:[%s4] sm:$0x1]
    %v140 = vlaneseq
    %v141 = vshrl.u32 %v140, 7
    %v142 = vsub.s32 0, %v141
    %v143 = vrot.slane %v138, %v142
    %v147 = vunpack.c.l.b16 %v120
    %v148 = vunpack.c.l.b16 %v121
    %v149 = vpack.c.b16 %v148, %v147
    %v167 = vunpack.c.l.b16 %v122
    %v168 = vunpack.c.l.b16 %v123
    %v169 = vunpack.c.l.b16 %v124
    %v170 = vunpack.c.l.b16 %v125
    %v171 = vunpack.c.l.b16 %v126
    %v172 = vunpack.c.l.b16 %v127
    %v173 = vunpack.c.l.b16 %v128
    %v174 = vunpack.c.l.b16 %v129
    %v175 = vunpack.c.l.b16 %v130
    %v176 = vunpack.c.l.b16 %v131
    %v177 = vunpack.c.l.b16 %v132
    %v178 = vunpack.c.l.b16 %v133
    %v179 = vunpack.c.l.b16 %v134
    %v180 = vunpack.c.l.b16 %v135
    %v181 = vunpack.c.l.b16 %v136
    %v182 = vunpack.c.l.b16 %v137
    %v183 = vpack.c.b16 %v168, %v167
    %v184 = vpack.c.b16 %v170, %v169
    %v185 = vpack.c.b16 %v172, %v171
    %v186 = vpack.c.b16 %v174, %v173
    %v187 = vpack.c.b16 %v176, %v175
    %v188 = vpack.c.b16 %v178, %v177
    %v189 = vpack.c.b16 %v180, %v179
    %v190 = vpack.c.b16 %v182, %v181
    %199 = vmatprep.subr.bf16.mxu0 0
    %200 = vmatpush1.bf16.msra.mxu0 %v183
    %201 = vmatprep.subr.bf16.mxu0 0
    %202 = vmatpush1.bf16.msra.mxu0 %v184
    %203 = vmatprep.subr.bf16.mxu0 0
    %204 = vmatpush1.bf16.msra.mxu0 %v185
    %205 = vmatprep.subr.bf16.mxu0 0
    %206 = vmatpush1.bf16.msra.mxu0 %v186
    %207 = vmatprep.subr.bf16.mxu0 0
    %208 = vmatpush1.bf16.msra.mxu0 %v187
    %209 = vmatprep.subr.bf16.mxu0 0
    %210 = vmatpush1.bf16.msra.mxu0 %v188
    %211 = vmatprep.subr.bf16.mxu0 0
    %212 = vmatpush1.bf16.msra.mxu0 %v189
    %213 = vmatprep.subr.bf16.mxu0 0
    %214 = vmatpush1.bf16.msra.mxu0 %v190
    %215 = vmatprep.subr.bf16.mxu0 0
    %216 = vmatpush1.bf16.msra.mxu0 0
    %217 = vmatprep.subr.bf16.mxu0 0
    %218 = vmatpush1.bf16.msra.mxu0 0
    %219 = vmatprep.subr.bf16.mxu0 0
    %220 = vmatpush1.bf16.msra.mxu0 0
    %221 = vmatprep.subr.bf16.mxu0 0
    %222 = vmatpush1.bf16.msra.mxu0 0
    %223 = vmatprep.subr.bf16.mxu0 0
    %224 = vmatpush1.bf16.msra.mxu0 0
    %225 = vmatprep.subr.bf16.mxu0 0
    %226 = vmatpush1.bf16.msra.mxu0 0
    %227 = vmatprep.subr.bf16.mxu0 0
    %228 = vmatpush1.bf16.msra.mxu0 0
    %229 = vmatprep.subr.bf16.mxu0 0
    %230 = vmatpush1.bf16.msra.mxu0 0
    %231 = vmatprep.mubr.bf16.mxu0 0
    %232 = vmatmul.mubr.bf16.gmra.mrb[0].mxu0 %v149
    %v233 = vpop.f32.mrb[0].mxu0
    %v234 = vadd.f32 %v143, %v233
    %v235 = vpop.f32.mrb[0].mxu0
    %v236 = vpop.f32.mrb[0].mxu0
    %v237 = vadd.f32 %v143, %v236
    %v238 = vpop.f32.mrb[0].mxu0
    %239 = vdwg.mxu0
    %v240 = vmax.f32 %v234, 0.0
    %v241 = vmax.f32 %v237, 0.0
    %v242 = vld [vmem:[#allocation5] sm:$0xf]
    %v243 = vld [vmem:[#allocation5 + $0x4] sm:$0xf]
    %v246 = vunpack.c.l.b16 %v242
    %v247 = vunpack.c.l.b16 %v243
    %v248 = vpack.c.b16 %v247, %v246
    %v250 = vpack.i.b16 %v248, %v248
    %v252 = vlaneseq
    %v253 = vshrl.u32 %v252, 7
    %v254 = vsub.s32 0, %v253
    %v255 = vrot.slane %v250, %v254
    %257 = vbcast.lane.c.b16.xlu0 %v255, 256
    %v258 = vpop.permute.xlu0 %257
    %v259 = vshrl.u32 %v248, 16
    %v260 = vpack.i.b16 %v259, %v259
    %v262 = vlaneseq
    %v263 = vshrl.u32 %v262, 7
    %v264 = vsub.s32 0, %v263
    %v265 = vrot.slane %v260, %v264
    %267 = vbcast.lane.c.b16.xlu0 %v265, 256
    %v268 = vpop.permute.xlu0 %267
    %v269 = vlaneseq
    %v270 = vshrl.u32 %v269, 7
    %v271 = vsub.s32 1, %v270
    %v272 = vrot.slane %v250, %v271
    %274 = vbcast.lane.c.b16.xlu0 %v272, 256
    %v275 = vpop.permute.xlu0 %274
    %v276 = vlaneseq
    %v277 = vshrl.u32 %v276, 7
    %v278 = vsub.s32 1, %v277
    %v279 = vrot.slane %v260, %v278
    %281 = vbcast.lane.c.b16.xlu0 %v279, 256
    %v282 = vpop.permute.xlu0 %281
    %v283 = vlaneseq
    %v284 = vshrl.u32 %v283, 7
    %v285 = vsub.s32 2, %v284
    %v286 = vrot.slane %v250, %v285
    %288 = vbcast.lane.c.b16.xlu0 %v286, 256
    %v289 = vpop.permute.xlu0 %288
    %v290 = vlaneseq
    %v291 = vshrl.u32 %v290, 7
    %v292 = vsub.s32 2, %v291
    %v293 = vrot.slane %v260, %v292
    %295 = vbcast.lane.c.b16.xlu0 %v293, 256
    %v296 = vpop.permute.xlu0 %295
    %v297 = vlaneseq
    %v298 = vshrl.u32 %v297, 7
    %v299 = vsub.s32 3, %v298
    %v300 = vrot.slane %v250, %v299
    %302 = vbcast.lane.c.b16.xlu0 %v300, 256
    %v303 = vpop.permute.xlu0 %302
    %v304 = vlaneseq
    %v305 = vshrl.u32 %v304, 7
    %v306 = vsub.s32 3, %v305
    %v307 = vrot.slane %v260, %v306
    %309 = vbcast.lane.c.b16.xlu0 %v307, 256
    %v310 = vpop.permute.xlu0 %309
    %v311 = vlaneseq
    %v312 = vshrl.u32 %v311, 7
    %v313 = vsub.s32 4, %v312
    %v314 = vrot.slane %v250, %v313
    %316 = vbcast.lane.c.b16.xlu0 %v314, 256
    %v317 = vpop.permute.xlu0 %316
    %v318 = vlaneseq
    %v319 = vshrl.u32 %v318, 7
    %v320 = vsub.s32 4, %v319
    %v321 = vrot.slane %v260, %v320
    %323 = vbcast.lane.c.b16.xlu0 %v321, 256
    %v324 = vpop.permute.xlu0 %323
    %v325 = vlaneseq
    %v326 = vshrl.u32 %v325, 7
    %v327 = vsub.s32 5, %v326
    %v328 = vrot.slane %v250, %v327
    %330 = vbcast.lane.c.b16.xlu0 %v328, 256
    %v331 = vpop.permute.xlu0 %330
    %v332 = vlaneseq
    %v333 = vshrl.u32 %v332, 7
    %v334 = vsub.s32 5, %v333
    %v335 = vrot.slane %v260, %v334
    %337 = vbcast.lane.c.b16.xlu0 %v335, 256
    %v338 = vpop.permute.xlu0 %337
    %v339 = vlaneseq
    %v340 = vshrl.u32 %v339, 7
    %v341 = vsub.s32 6, %v340
    %v342 = vrot.slane %v250, %v341
    %344 = vbcast.lane.c.b16.xlu0 %v342, 256
    %v345 = vpop.permute.xlu0 %344
    %v346 = vlaneseq
    %v347 = vshrl.u32 %v346, 7
    %v348 = vsub.s32 6, %v347
    %v349 = vrot.slane %v260, %v348
    %351 = vbcast.lane.c.b16.xlu0 %v349, 256
    %v352 = vpop.permute.xlu0 %351
    %v353 = vlaneseq
    %v354 = vshrl.u32 %v353, 7
    %v355 = vsub.s32 7, %v354
    %v356 = vrot.slane %v250, %v355
    %358 = vbcast.lane.c.b16.xlu0 %v356, 256
    %v359 = vpop.permute.xlu0 %358
    %v360 = vlaneseq
    %v361 = vshrl.u32 %v360, 7
    %v362 = vsub.s32 7, %v361
    %v363 = vrot.slane %v260, %v362
    %365 = vbcast.lane.c.b16.xlu0 %v363, 256
    %v366 = vpop.permute.xlu0 %365
    %vm367 = vcmp.gt.bf16.partialorder %v258, 0
    %vm368 = vcmp.gt.bf16.partialorder %v268, 0
    %vm369 = vcmp.gt.bf16.partialorder %v275, 0
    %vm370 = vcmp.gt.bf16.partialorder %v282, 0
    %vm371 = vcmp.gt.bf16.partialorder %v289, 0
    %vm372 = vcmp.gt.bf16.partialorder %v296, 0
    %vm373 = vcmp.gt.bf16.partialorder %v303, 0
    %vm374 = vcmp.gt.bf16.partialorder %v310, 0
    %vm375 = vcmp.gt.bf16.partialorder %v317, 0
    %vm376 = vcmp.gt.bf16.partialorder %v324, 0
    %vm377 = vcmp.gt.bf16.partialorder %v331, 0
    %vm378 = vcmp.gt.bf16.partialorder %v338, 0
    %vm379 = vcmp.gt.bf16.partialorder %v345, 0
    %vm380 = vcmp.gt.bf16.partialorder %v352, 0
    %vm381 = vcmp.gt.bf16.partialorder %v359, 0
    %vm382 = vcmp.gt.bf16.partialorder %v366, 0
    %v383 = vsel %vm367, 65537, 0
    %v384 = vsel %vm368, 65537, 0
    %v385 = vsel %vm369, 65537, 0
    %v386 = vsel %vm370, 65537, 0
    %v387 = vsel %vm371, 65537, 0
    %v388 = vsel %vm372, 65537, 0
    %v389 = vsel %vm373, 65537, 0
    %v390 = vsel %vm374, 65537, 0
    %v391 = vsel %vm375, 65537, 0
    %v392 = vsel %vm376, 65537, 0
    %v393 = vsel %vm377, 65537, 0
    %v394 = vsel %vm378, 65537, 0
    %v395 = vsel %vm379, 65537, 0
    %v396 = vsel %vm380, 65537, 0
    %v397 = vsel %vm381, 65537, 0
    %v398 = vsel %vm382, 65537, 0
    %v399 = vunpack.c.l.b16 %v383
    %v400 = vunpack.c.l.b16 %v384
    %v401 = vunpack.c.l.b16 %v385
    %v402 = vunpack.c.l.b16 %v386
    %v403 = vunpack.c.l.b16 %v387
    %v404 = vunpack.c.l.b16 %v388
    %v405 = vunpack.c.l.b16 %v389
    %v406 = vunpack.c.l.b16 %v390
    %v407 = vunpack.c.l.b16 %v391
    %v408 = vunpack.c.l.b16 %v392
    %v409 = vunpack.c.l.b16 %v393
    %v410 = vunpack.c.l.b16 %v394
    %v411 = vunpack.c.l.b16 %v395
    %v412 = vunpack.c.l.b16 %v396
    %v413 = vunpack.c.l.b16 %v397
    %v414 = vunpack.c.l.b16 %v398
    %vm415 = vcmp.ne.s32.totalorder %v399, 0
    %vm416 = vcmp.ne.s32.totalorder %v400, 0
    %vm417 = vcmp.ne.s32.totalorder %v401, 0
    %vm418 = vcmp.ne.s32.totalorder %v402, 0
    %vm419 = vcmp.ne.s32.totalorder %v403, 0
    %vm420 = vcmp.ne.s32.totalorder %v404, 0
    %vm421 = vcmp.ne.s32.totalorder %v405, 0
    %vm422 = vcmp.ne.s32.totalorder %v406, 0
    %vm423 = vcmp.ne.s32.totalorder %v407, 0
    %vm424 = vcmp.ne.s32.totalorder %v408, 0
    %vm425 = vcmp.ne.s32.totalorder %v409, 0
    %vm426 = vcmp.ne.s32.totalorder %v410, 0
    %vm427 = vcmp.ne.s32.totalorder %v411, 0
    %vm428 = vcmp.ne.s32.totalorder %v412, 0
    %vm429 = vcmp.ne.s32.totalorder %v413, 0
    %vm430 = vcmp.ne.s32.totalorder %v414, 0
    %v431 = vsel %vm415, 1, 0
    %v432 = vsel %vm416, 1, 0
    %v433 = vsel %vm417, 1, 0
    %v434 = vsel %vm418, 1, 0
    %v435 = vsel %vm419, 1, 0
    %v436 = vsel %vm420, 1, 0
    %v437 = vsel %vm421, 1, 0
    %v438 = vsel %vm422, 1, 0
    %v439 = vsel %vm423, 1, 0
    %v440 = vsel %vm424, 1, 0
    %v441 = vsel %vm425, 1, 0
    %v442 = vsel %vm426, 1, 0
    %v443 = vsel %vm427, 1, 0
    %v444 = vsel %vm428, 1, 0
    %v445 = vsel %vm429, 1, 0
    %v446 = vsel %vm430, 1, 0
    %447 = vset.pattern.permute.xlu0 0
    %448 = vperm.xlu0 %447, %v431
    %v449 = vpop.permute.xlu0 %448
    %450 = vset.pattern.permute.xlu0 0
    %451 = vperm.xlu0 %450, %v432
    %v452 = vpop.permute.xlu0 %451
    %453 = vset.pattern.permute.xlu0 0
    %454 = vperm.xlu0 %453, %v433
    %v455 = vpop.permute.xlu0 %454
    %456 = vset.pattern.permute.xlu0 0
    %457 = vperm.xlu0 %456, %v434
    %v458 = vpop.permute.xlu0 %457
    %459 = vset.pattern.permute.xlu0 0
    %460 = vperm.xlu0 %459, %v435
    %v461 = vpop.permute.xlu0 %460
    %462 = vset.pattern.permute.xlu0 0
    %463 = vperm.xlu0 %462, %v436
    %v464 = vpop.permute.xlu0 %463
    %465 = vset.pattern.permute.xlu0 0
    %466 = vperm.xlu0 %465, %v437
    %v467 = vpop.permute.xlu0 %466
    %468 = vset.pattern.permute.xlu0 0
    %469 = vperm.xlu0 %468, %v438
    %v470 = vpop.permute.xlu0 %469
    %471 = vset.pattern.permute.xlu0 0
    %472 = vperm.xlu0 %471, %v439
    %v473 = vpop.permute.xlu0 %472
    %474 = vset.pattern.permute.xlu0 0
    %475 = vperm.xlu0 %474, %v440
    %v476 = vpop.permute.xlu0 %475
    %477 = vset.pattern.permute.xlu0 0
    %478 = vperm.xlu0 %477, %v441
    %v479 = vpop.permute.xlu0 %478
    %480 = vset.pattern.permute.xlu0 0
    %481 = vperm.xlu0 %480, %v442
    %v482 = vpop.permute.xlu0 %481
    %483 = vset.pattern.permute.xlu0 0
    %484 = vperm.xlu0 %483, %v443
    %v485 = vpop.permute.xlu0 %484
    %486 = vset.pattern.permute.xlu0 0
    %487 = vperm.xlu0 %486, %v444
    %v488 = vpop.permute.xlu0 %487
    %489 = vset.pattern.permute.xlu0 0
    %490 = vperm.xlu0 %489, %v445
    %v491 = vpop.permute.xlu0 %490
    %492 = vset.pattern.permute.xlu0 0
    %493 = vperm.xlu0 %492, %v446
    %v494 = vpop.permute.xlu0 %493
    %vm495 = vcmp.eq.s32.totalorder %v449, 1
    %vm496 = vcmp.eq.s32.totalorder %v452, 1
    %vm497 = vcmp.eq.s32.totalorder %v455, 1
    %vm498 = vcmp.eq.s32.totalorder %v458, 1
    %vm499 = vcmp.eq.s32.totalorder %v461, 1
    %vm500 = vcmp.eq.s32.totalorder %v464, 1
    %vm501 = vcmp.eq.s32.totalorder %v467, 1
    %vm502 = vcmp.eq.s32.totalorder %v470, 1
    %vm503 = vcmp.eq.s32.totalorder %v473, 1
    %vm504 = vcmp.eq.s32.totalorder %v476, 1
    %vm505 = vcmp.eq.s32.totalorder %v479, 1
    %vm506 = vcmp.eq.s32.totalorder %v482, 1
    %vm507 = vcmp.eq.s32.totalorder %v485, 1
    %vm508 = vcmp.eq.s32.totalorder %v488, 1
    %vm509 = vcmp.eq.s32.totalorder %v491, 1
    %vm510 = vcmp.eq.s32.totalorder %v494, 1
    %v511 = vsel %vm495, %v240, -1e+30
    %v512 = vsel %vm496, %v240, -1e+30
    %v513 = vsel %vm497, %v240, -1e+30
    %v514 = vsel %vm498, %v240, -1e+30
    %v515 = vsel %vm499, %v240, -1e+30
    %v516 = vsel %vm500, %v240, -1e+30
    %v517 = vsel %vm501, %v240, -1e+30
    %v518 = vsel %vm502, %v240, -1e+30
    %v519 = vsel %vm503, %v240, -1e+30
    %v520 = vsel %vm504, %v240, -1e+30
    %v521 = vsel %vm505, %v240, -1e+30
    %v522 = vsel %vm506, %v240, -1e+30
    %v523 = vsel %vm507, %v240, -1e+30
    %v524 = vsel %vm508, %v240, -1e+30
    %v525 = vsel %vm509, %v240, -1e+30
    %v526 = vsel %vm510, %v240, -1e+30
    %v527 = vrot.slane %v511, 4
    %v528 = vmax.f32 %v511, %v527
    %v529 = vrot.slane %v528, 2
    %v530 = vmax.f32 %v528, %v529
    %v531 = vrot.slane %v530, 1
    %v532 = vmax.f32 %v530, %v531
    %v533 = vrot.slane %v512, 4
    %v534 = vmax.f32 %v512, %v533
    %v535 = vrot.slane %v534, 2
    %v536 = vmax.f32 %v534, %v535
    %v537 = vrot.slane %v536, 1
    %v538 = vmax.f32 %v536, %v537
    %v539 = vrot.slane %v513, 4
    %v540 = vmax.f32 %v513, %v539
    %v541 = vrot.slane %v540, 2
    %v542 = vmax.f32 %v540, %v541
    %v543 = vrot.slane %v542, 1
    %v544 = vmax.f32 %v542, %v543
    %v545 = vrot.slane %v514, 4
    %v546 = vmax.f32 %v514, %v545
    %v547 = vrot.slane %v546, 2
    %v548 = vmax.f32 %v546, %v547
    %v549 = vrot.slane %v548, 1
    %v550 = vmax.f32 %v548, %v549
    %v551 = vrot.slane %v515, 4
    %v552 = vmax.f32 %v515, %v551
    %v553 = vrot.slane %v552, 2
    %v554 = vmax.f32 %v552, %v553
    %v555 = vrot.slane %v554, 1
    %v556 = vmax.f32 %v554, %v555
    %v557 = vrot.slane %v516, 4
    %v558 = vmax.f32 %v516, %v557
    %v559 = vrot.slane %v558, 2
    %v560 = vmax.f32 %v558, %v559
    %v561 = vrot.slane %v560, 1
    %v562 = vmax.f32 %v560, %v561
    %v563 = vrot.slane %v517, 4
    %v564 = vmax.f32 %v517, %v563
    %v565 = vrot.slane %v564, 2
    %v566 = vmax.f32 %v564, %v565
    %v567 = vrot.slane %v566, 1
    %v568 = vmax.f32 %v566, %v567
    %v569 = vrot.slane %v518, 4
    %v570 = vmax.f32 %v518, %v569
    %v571 = vrot.slane %v570, 2
    %v572 = vmax.f32 %v570, %v571
    %v573 = vrot.slane %v572, 1
    %v574 = vmax.f32 %v572, %v573
    %v575 = vrot.slane %v519, 4
    %v576 = vmax.f32 %v519, %v575
    %v577 = vrot.slane %v576, 2
    %v578 = vmax.f32 %v576, %v577
    %v579 = vrot.slane %v578, 1
    %v580 = vmax.f32 %v578, %v579
    %v581 = vrot.slane %v520, 4
    %v582 = vmax.f32 %v520, %v581
    %v583 = vrot.slane %v582, 2
    %v584 = vmax.f32 %v582, %v583
    %v585 = vrot.slane %v584, 1
    %v586 = vmax.f32 %v584, %v585
    %v587 = vrot.slane %v521, 4
    %v588 = vmax.f32 %v521, %v587
    %v589 = vrot.slane %v588, 2
    %v590 = vmax.f32 %v588, %v589
    %v591 = vrot.slane %v590, 1
    %v592 = vmax.f32 %v590, %v591
    %v593 = vrot.slane %v522, 4
    %v594 = vmax.f32 %v522, %v593
    %v595 = vrot.slane %v594, 2
    %v596 = vmax.f32 %v594, %v595
    %v597 = vrot.slane %v596, 1
    %v598 = vmax.f32 %v596, %v597
    %v599 = vrot.slane %v523, 4
    %v600 = vmax.f32 %v523, %v599
    %v601 = vrot.slane %v600, 2
    %v602 = vmax.f32 %v600, %v601
    %v603 = vrot.slane %v602, 1
    %v604 = vmax.f32 %v602, %v603
    %v605 = vrot.slane %v524, 4
    %v606 = vmax.f32 %v524, %v605
    %v607 = vrot.slane %v606, 2
    %v608 = vmax.f32 %v606, %v607
    %v609 = vrot.slane %v608, 1
    %v610 = vmax.f32 %v608, %v609
    %v611 = vrot.slane %v525, 4
    %v612 = vmax.f32 %v525, %v611
    %v613 = vrot.slane %v612, 2
    %v614 = vmax.f32 %v612, %v613
    %v615 = vrot.slane %v614, 1
    %v616 = vmax.f32 %v614, %v615
    %v617 = vrot.slane %v526, 4
    %v618 = vmax.f32 %v526, %v617
    %v619 = vrot.slane %v618, 2
    %v620 = vmax.f32 %v618, %v619
    %v621 = vrot.slane %v620, 1
    %v622 = vmax.f32 %v620, %v621
    %v623 = vmax.f32 %v532, -1e+30
    %v624 = vmax.f32 %v538, -1e+30
    %v625 = vmax.f32 %v544, -1e+30
    %v626 = vmax.f32 %v550, -1e+30
    %v627 = vmax.f32 %v556, -1e+30
    %v628 = vmax.f32 %v562, -1e+30
    %v629 = vmax.f32 %v568, -1e+30
    %v630 = vmax.f32 %v574, -1e+30
    %v631 = vmax.f32 %v580, -1e+30
    %v632 = vmax.f32 %v586, -1e+30
    %v633 = vmax.f32 %v592, -1e+30
    %v634 = vmax.f32 %v598, -1e+30
    %v635 = vmax.f32 %v604, -1e+30
    %v636 = vmax.f32 %v610, -1e+30
    %v637 = vmax.f32 %v616, -1e+30
    %v638 = vmax.f32 %v622, -1e+30
    %s640 = sor.u32 256, 8
    %641 = vbcast.lane.c.b16.xlu0 %v255, %s640
    %v642 = vpop.permute.xlu0 %641
    %s644 = sor.u32 256, 8
    %645 = vbcast.lane.c.b16.xlu0 %v265, %s644
    %v646 = vpop.permute.xlu0 %645
    %s648 = sor.u32 256, 8
    %649 = vbcast.lane.c.b16.xlu0 %v272, %s648
    %v650 = vpop.permute.xlu0 %649
    %s652 = sor.u32 256, 8
    %653 = vbcast.lane.c.b16.xlu0 %v279, %s652
    %v654 = vpop.permute.xlu0 %653
    %s656 = sor.u32 256, 8
    %657 = vbcast.lane.c.b16.xlu0 %v286, %s656
    %v658 = vpop.permute.xlu0 %657
    %s660 = sor.u32 256, 8
    %661 = vbcast.lane.c.b16.xlu0 %v293, %s660
    %v662 = vpop.permute.xlu0 %661
    %s664 = sor.u32 256, 8
    %665 = vbcast.lane.c.b16.xlu0 %v300, %s664
    %v666 = vpop.permute.xlu0 %665
    %s668 = sor.u32 256, 8
    %669 = vbcast.lane.c.b16.xlu0 %v307, %s668
    %v670 = vpop.permute.xlu0 %669
    %s672 = sor.u32 256, 8
    %673 = vbcast.lane.c.b16.xlu0 %v314, %s672
    %v674 = vpop.permute.xlu0 %673
    %s676 = sor.u32 256, 8
    %677 = vbcast.lane.c.b16.xlu0 %v321, %s676
    %v678 = vpop.permute.xlu0 %677
    %s680 = sor.u32 256, 8
    %681 = vbcast.lane.c.b16.xlu0 %v328, %s680
    %v682 = vpop.permute.xlu0 %681
    %s684 = sor.u32 256, 8
    %685 = vbcast.lane.c.b16.xlu0 %v335, %s684
    %v686 = vpop.permute.xlu0 %685
    %s688 = sor.u32 256, 8
    %689 = vbcast.lane.c.b16.xlu0 %v342, %s688
    %v690 = vpop.permute.xlu0 %689
    %s692 = sor.u32 256, 8
    %693 = vbcast.lane.c.b16.xlu0 %v349, %s692
    %v694 = vpop.permute.xlu0 %693
    %s696 = sor.u32 256, 8
    %697 = vbcast.lane.c.b16.xlu0 %v356, %s696
    %v698 = vpop.permute.xlu0 %697
    %s700 = sor.u32 256, 8
    %701 = vbcast.lane.c.b16.xlu0 %v363, %s700
    %v702 = vpop.permute.xlu0 %701
    %vm703 = vcmp.gt.bf16.partialorder %v642, 0
    %vm704 = vcmp.gt.bf16.partialorder %v646, 0
    %vm705 = vcmp.gt.bf16.partialorder %v650, 0
    %vm706 = vcmp.gt.bf16.partialorder %v654, 0
    %vm707 = vcmp.gt.bf16.partialorder %v658, 0
    %vm708 = vcmp.gt.bf16.partialorder %v662, 0
    %vm709 = vcmp.gt.bf16.partialorder %v666, 0
    %vm710 = vcmp.gt.bf16.partialorder %v670, 0
    %vm711 = vcmp.gt.bf16.partialorder %v674, 0
    %vm712 = vcmp.gt.bf16.partialorder %v678, 0
    %vm713 = vcmp.gt.bf16.partialorder %v682, 0
    %vm714 = vcmp.gt.bf16.partialorder %v686, 0
    %vm715 = vcmp.gt.bf16.partialorder %v690, 0
    %vm716 = vcmp.gt.bf16.partialorder %v694, 0
    %vm717 = vcmp.gt.bf16.partialorder %v698, 0
    %vm718 = vcmp.gt.bf16.partialorder %v702, 0
    %v719 = vsel %vm703, 65537, 0
    %v720 = vsel %vm704, 65537, 0
    %v721 = vsel %vm705, 65537, 0
    %v722 = vsel %vm706, 65537, 0
    %v723 = vsel %vm707, 65537, 0
    %v724 = vsel %vm708, 65537, 0
    %v725 = vsel %vm709, 65537, 0
    %v726 = vsel %vm710, 65537, 0
    %v727 = vsel %vm711, 65537, 0
    %v728 = vsel %vm712, 65537, 0
    %v729 = vsel %vm713, 65537, 0
    %v730 = vsel %vm714, 65537, 0
    %v731 = vsel %vm715, 65537, 0
    %v732 = vsel %vm716, 65537, 0
    %v733 = vsel %vm717, 65537, 0
    %v734 = vsel %vm718, 65537, 0
    %v735 = vunpack.c.l.b16 %v719
    %v736 = vunpack.c.l.b16 %v720
    %v737 = vunpack.c.l.b16 %v721
    %v738 = vunpack.c.l.b16 %v722
    %v739 = vunpack.c.l.b16 %v723
    %v740 = vunpack.c.l.b16 %v724
    %v741 = vunpack.c.l.b16 %v725
    %v742 = vunpack.c.l.b16 %v726
    %v743 = vunpack.c.l.b16 %v727
    %v744 = vunpack.c.l.b16 %v728
    %v745 = vunpack.c.l.b16 %v729
    %v746 = vunpack.c.l.b16 %v730
    %v747 = vunpack.c.l.b16 %v731
    %v748 = vunpack.c.l.b16 %v732
    %v749 = vunpack.c.l.b16 %v733
    %v750 = vunpack.c.l.b16 %v734
    %vm751 = vcmp.ne.s32.totalorder %v735, 0
    %vm752 = vcmp.ne.s32.totalorder %v736, 0
    %vm753 = vcmp.ne.s32.totalorder %v737, 0
    %vm754 = vcmp.ne.s32.totalorder %v738, 0
    %vm755 = vcmp.ne.s32.totalorder %v739, 0
    %vm756 = vcmp.ne.s32.totalorder %v740, 0
    %vm757 = vcmp.ne.s32.totalorder %v741, 0
    %vm758 = vcmp.ne.s32.totalorder %v742, 0
    %vm759 = vcmp.ne.s32.totalorder %v743, 0
    %vm760 = vcmp.ne.s32.totalorder %v744, 0
    %vm761 = vcmp.ne.s32.totalorder %v745, 0
    %vm762 = vcmp.ne.s32.totalorder %v746, 0
    %vm763 = vcmp.ne.s32.totalorder %v747, 0
    %vm764 = vcmp.ne.s32.totalorder %v748, 0
    %vm765 = vcmp.ne.s32.totalorder %v749, 0
    %vm766 = vcmp.ne.s32.totalorder %v750, 0
    %v767 = vsel %vm751, 1, 0
    %v768 = vsel %vm752, 1, 0
    %v769 = vsel %vm753, 1, 0
    %v770 = vsel %vm754, 1, 0
    %v771 = vsel %vm755, 1, 0
    %v772 = vsel %vm756, 1, 0
    %v773 = vsel %vm757, 1, 0
    %v774 = vsel %vm758, 1, 0
    %v775 = vsel %vm759, 1, 0
    %v776 = vsel %vm760, 1, 0
    %v777 = vsel %vm761, 1, 0
    %v778 = vsel %vm762, 1, 0
    %v779 = vsel %vm763, 1, 0
    %v780 = vsel %vm764, 1, 0
    %v781 = vsel %vm765, 1, 0
    %v782 = vsel %vm766, 1, 0
    %783 = vset.pattern.permute.xlu0 0
    %784 = vperm.xlu0 %783, %v767
    %v785 = vpop.permute.xlu0 %784
    %786 = vset.pattern.permute.xlu0 0
    %787 = vperm.xlu0 %786, %v768
    %v788 = vpop.permute.xlu0 %787
    %789 = vset.pattern.permute.xlu0 0
    %790 = vperm.xlu0 %789, %v769
    %v791 = vpop.permute.xlu0 %790
    %792 = vset.pattern.permute.xlu0 0
    %793 = vperm.xlu0 %792, %v770
    %v794 = vpop.permute.xlu0 %793
    %795 = vset.pattern.permute.xlu0 0
    %796 = vperm.xlu0 %795, %v771
    %v797 = vpop.permute.xlu0 %796
    %798 = vset.pattern.permute.xlu0 0
    %799 = vperm.xlu0 %798, %v772
    %v800 = vpop.permute.xlu0 %799
    %801 = vset.pattern.permute.xlu0 0
    %802 = vperm.xlu0 %801, %v773
    %v803 = vpop.permute.xlu0 %802
    %804 = vset.pattern.permute.xlu0 0
    %805 = vperm.xlu0 %804, %v774
    %v806 = vpop.permute.xlu0 %805
    %807 = vset.pattern.permute.xlu0 0
    %808 = vperm.xlu0 %807, %v775
    %v809 = vpop.permute.xlu0 %808
    %810 = vset.pattern.permute.xlu0 0
    %811 = vperm.xlu0 %810, %v776
    %v812 = vpop.permute.xlu0 %811
    %813 = vset.pattern.permute.xlu0 0
    %814 = vperm.xlu0 %813, %v777
    %v815 = vpop.permute.xlu0 %814
    %816 = vset.pattern.permute.xlu0 0
    %817 = vperm.xlu0 %816, %v778
    %v818 = vpop.permute.xlu0 %817
    %819 = vset.pattern.permute.xlu0 0
    %820 = vperm.xlu0 %819, %v779
    %v821 = vpop.permute.xlu0 %820
    %822 = vset.pattern.permute.xlu0 0
    %823 = vperm.xlu0 %822, %v780
    %v824 = vpop.permute.xlu0 %823
    %825 = vset.pattern.permute.xlu0 0
    %826 = vperm.xlu0 %825, %v781
    %v827 = vpop.permute.xlu0 %826
    %828 = vset.pattern.permute.xlu0 0
    %829 = vperm.xlu0 %828, %v782
    %v830 = vpop.permute.xlu0 %829
    %vm831 = vcmp.eq.s32.totalorder %v785, 1
    %vm832 = vcmp.eq.s32.totalorder %v788, 1
    %vm833 = vcmp.eq.s32.totalorder %v791, 1
    %vm834 = vcmp.eq.s32.totalorder %v794, 1
    %vm835 = vcmp.eq.s32.totalorder %v797, 1
    %vm836 = vcmp.eq.s32.totalorder %v800, 1
    %vm837 = vcmp.eq.s32.totalorder %v803, 1
    %vm838 = vcmp.eq.s32.totalorder %v806, 1
    %vm839 = vcmp.eq.s32.totalorder %v809, 1
    %vm840 = vcmp.eq.s32.totalorder %v812, 1
    %vm841 = vcmp.eq.s32.totalorder %v815, 1
    %vm842 = vcmp.eq.s32.totalorder %v818, 1
    %vm843 = vcmp.eq.s32.totalorder %v821, 1
    %vm844 = vcmp.eq.s32.totalorder %v824, 1
    %vm845 = vcmp.eq.s32.totalorder %v827, 1
    %vm846 = vcmp.eq.s32.totalorder %v830, 1
    %v847 = vsel %vm831, %v241, -1e+30
    %v848 = vsel %vm832, %v241, -1e+30
    %v849 = vsel %vm833, %v241, -1e+30
    %v850 = vsel %vm834, %v241, -1e+30
    %v851 = vsel %vm835, %v241, -1e+30
    %v852 = vsel %vm836, %v241, -1e+30
    %v853 = vsel %vm837, %v241, -1e+30
    %v854 = vsel %vm838, %v241, -1e+30
    %v855 = vsel %vm839, %v241, -1e+30
    %v856 = vsel %vm840, %v241, -1e+30
    %v857 = vsel %vm841, %v241, -1e+30
    %v858 = vsel %vm842, %v241, -1e+30
    %v859 = vsel %vm843, %v241, -1e+30
    %v860 = vsel %vm844, %v241, -1e+30
    %v861 = vsel %vm845, %v241, -1e+30
    %v862 = vsel %vm846, %v241, -1e+30
    %v863 = vrot.slane %v847, 4
    %v864 = vmax.f32 %v847, %v863
    %v865 = vrot.slane %v864, 2
    %v866 = vmax.f32 %v864, %v865
    %v867 = vrot.slane %v866, 1
    %v868 = vmax.f32 %v866, %v867
    %v869 = vrot.slane %v848, 4
    %v870 = vmax.f32 %v848, %v869
    %v871 = vrot.slane %v870, 2
    %v872 = vmax.f32 %v870, %v871
    %v873 = vrot.slane %v872, 1
    %v874 = vmax.f32 %v872, %v873
    %v875 = vrot.slane %v849, 4
    %v876 = vmax.f32 %v849, %v875
    %v877 = vrot.slane %v876, 2
    %v878 = vmax.f32 %v876, %v877
    %v879 = vrot.slane %v878, 1
    %v880 = vmax.f32 %v878, %v879
    %v881 = vrot.slane %v850, 4
    %v882 = vmax.f32 %v850, %v881
    %v883 = vrot.slane %v882, 2
    %v884 = vmax.f32 %v882, %v883
    %v885 = vrot.slane %v884, 1
    %v886 = vmax.f32 %v884, %v885
    %v887 = vrot.slane %v851, 4
    %v888 = vmax.f32 %v851, %v887
    %v889 = vrot.slane %v888, 2
    %v890 = vmax.f32 %v888, %v889
    %v891 = vrot.slane %v890, 1
    %v892 = vmax.f32 %v890, %v891
    %v893 = vrot.slane %v852, 4
    %v894 = vmax.f32 %v852, %v893
    %v895 = vrot.slane %v894, 2
    %v896 = vmax.f32 %v894, %v895
    %v897 = vrot.slane %v896, 1
    %v898 = vmax.f32 %v896, %v897
    %v899 = vrot.slane %v853, 4
    %v900 = vmax.f32 %v853, %v899
    %v901 = vrot.slane %v900, 2
    %v902 = vmax.f32 %v900, %v901
    %v903 = vrot.slane %v902, 1
    %v904 = vmax.f32 %v902, %v903
    %v905 = vrot.slane %v854, 4
    %v906 = vmax.f32 %v854, %v905
    %v907 = vrot.slane %v906, 2
    %v908 = vmax.f32 %v906, %v907
    %v909 = vrot.slane %v908, 1
    %v910 = vmax.f32 %v908, %v909
    %v911 = vrot.slane %v855, 4
    %v912 = vmax.f32 %v855, %v911
    %v913 = vrot.slane %v912, 2
    %v914 = vmax.f32 %v912, %v913
    %v915 = vrot.slane %v914, 1
    %v916 = vmax.f32 %v914, %v915
    %v917 = vrot.slane %v856, 4
    %v918 = vmax.f32 %v856, %v917
    %v919 = vrot.slane %v918, 2
    %v920 = vmax.f32 %v918, %v919
    %v921 = vrot.slane %v920, 1
    %v922 = vmax.f32 %v920, %v921
    %v923 = vrot.slane %v857, 4
    %v924 = vmax.f32 %v857, %v923
    %v925 = vrot.slane %v924, 2
    %v926 = vmax.f32 %v924, %v925
    %v927 = vrot.slane %v926, 1
    %v928 = vmax.f32 %v926, %v927
    %v929 = vrot.slane %v858, 4
    %v930 = vmax.f32 %v858, %v929
    %v931 = vrot.slane %v930, 2
    %v932 = vmax.f32 %v930, %v931
    %v933 = vrot.slane %v932, 1
    %v934 = vmax.f32 %v932, %v933
    %v935 = vrot.slane %v859, 4
    %v936 = vmax.f32 %v859, %v935
    %v937 = vrot.slane %v936, 2
    %v938 = vmax.f32 %v936, %v937
    %v939 = vrot.slane %v938, 1
    %v940 = vmax.f32 %v938, %v939
    %v941 = vrot.slane %v860, 4
    %v942 = vmax.f32 %v860, %v941
    %v943 = vrot.slane %v942, 2
    %v944 = vmax.f32 %v942, %v943
    %v945 = vrot.slane %v944, 1
    %v946 = vmax.f32 %v944, %v945
    %v947 = vrot.slane %v861, 4
    %v948 = vmax.f32 %v861, %v947
    %v949 = vrot.slane %v948, 2
    %v950 = vmax.f32 %v948, %v949
    %v951 = vrot.slane %v950, 1
    %v952 = vmax.f32 %v950, %v951
    %v953 = vrot.slane %v862, 4
    %v954 = vmax.f32 %v862, %v953
    %v955 = vrot.slane %v954, 2
    %v956 = vmax.f32 %v954, %v955
    %v957 = vrot.slane %v956, 1
    %v958 = vmax.f32 %v956, %v957
    %v959 = vmax.f32 %v623, %v868
    %v960 = vmax.f32 %v624, %v874
    %v961 = vmax.f32 %v625, %v880
    %v962 = vmax.f32 %v626, %v886
    %v963 = vmax.f32 %v627, %v892
    %v964 = vmax.f32 %v628, %v898
    %v965 = vmax.f32 %v629, %v904
    %v966 = vmax.f32 %v630, %v910
    %v967 = vmax.f32 %v631, %v916
    %v968 = vmax.f32 %v632, %v922
    %v969 = vmax.f32 %v633, %v928
    %v970 = vmax.f32 %v634, %v934
    %v971 = vmax.f32 %v635, %v940
    %v972 = vmax.f32 %v636, %v946
    %v973 = vmax.f32 %v637, %v952
    %v974 = vmax.f32 %v638, %v958
    %v975 = vpack.c.bf16 %v959, %v959
    %v976 = vpack.c.bf16 %v960, %v960
    %v977 = vpack.c.bf16 %v961, %v961
    %v978 = vpack.c.bf16 %v962, %v962
    %v979 = vpack.c.bf16 %v963, %v963
    %v980 = vpack.c.bf16 %v964, %v964
    %v981 = vpack.c.bf16 %v965, %v965
    %v982 = vpack.c.bf16 %v966, %v966
    %v983 = vpack.c.bf16 %v967, %v967
    %v984 = vpack.c.bf16 %v968, %v968
    %v985 = vpack.c.bf16 %v969, %v969
    %v986 = vpack.c.bf16 %v970, %v970
    %v987 = vpack.c.bf16 %v971, %v971
    %v988 = vpack.c.bf16 %v972, %v972
    %v989 = vpack.c.bf16 %v973, %v973
    %v990 = vpack.c.bf16 %v974, %v974
    %v991 = vld [vmem:[#allocation7] sm:$0xf]
    %v992 = vld [vmem:[#allocation7 + $0x4] sm:$0xf]
    %v993 = vld [vmem:[#allocation7 + $0x8] sm:$0xf]
    %v994 = vld [vmem:[#allocation7 + $0xc] sm:$0xf]
    %v995 = vld [vmem:[#allocation7 + $0x10] sm:$0xf]
    %v996 = vld [vmem:[#allocation7 + $0x14] sm:$0xf]
    %v997 = vld [vmem:[#allocation7 + $0x18] sm:$0xf]
    %v998 = vld [vmem:[#allocation7 + $0x1c] sm:$0xf]
    %v999 = vld [vmem:[#allocation7 + $0x20] sm:$0xf]
    %v1000 = vld [vmem:[#allocation7 + $0x24] sm:$0xf]
    %v1001 = vld [vmem:[#allocation7 + $0x28] sm:$0xf]
    %v1002 = vld [vmem:[#allocation7 + $0x2c] sm:$0xf]
    %v1003 = vld [vmem:[#allocation7 + $0x30] sm:$0xf]
    %v1004 = vld [vmem:[#allocation7 + $0x34] sm:$0xf]
    %v1005 = vld [vmem:[#allocation7 + $0x38] sm:$0xf]
    %v1006 = vld [vmem:[#allocation7 + $0x3c] sm:$0xf]
    %v1007 = vld [vmem:[#allocation8] sm:$0xf]
    %v1008 = vld [vmem:[#allocation8 + $0x4] sm:$0xf]
    %v1009 = vld [vmem:[#allocation8 + $0x8] sm:$0xf]
    %v1010 = vld [vmem:[#allocation8 + $0xc] sm:$0xf]
    %v1011 = vld [vmem:[#allocation8 + $0x10] sm:$0xf]
    %v1012 = vld [vmem:[#allocation8 + $0x14] sm:$0xf]
    %v1013 = vld [vmem:[#allocation8 + $0x18] sm:$0xf]
    %v1014 = vld [vmem:[#allocation8 + $0x1c] sm:$0xf]
    %v1015 = vld [vmem:[#allocation8 + $0x20] sm:$0xf]
    %v1016 = vld [vmem:[#allocation8 + $0x24] sm:$0xf]
    %v1017 = vld [vmem:[#allocation8 + $0x28] sm:$0xf]
    %v1018 = vld [vmem:[#allocation8 + $0x2c] sm:$0xf]
    %v1019 = vld [vmem:[#allocation8 + $0x30] sm:$0xf]
    %v1020 = vld [vmem:[#allocation8 + $0x34] sm:$0xf]
    %v1021 = vld [vmem:[#allocation8 + $0x38] sm:$0xf]
    %v1022 = vld [vmem:[#allocation8 + $0x3c] sm:$0xf]
    %v1039 = vunpack.c.l.b16 %v1007
    %v1040 = vunpack.c.l.b16 %v1008
    %v1041 = vunpack.c.l.b16 %v1009
    %v1042 = vunpack.c.l.b16 %v1010
    %v1043 = vunpack.c.l.b16 %v1011
    %v1044 = vunpack.c.l.b16 %v1012
    %v1045 = vunpack.c.l.b16 %v1013
    %v1046 = vunpack.c.l.b16 %v1014
    %v1047 = vunpack.c.l.b16 %v1015
    %v1048 = vunpack.c.l.b16 %v1016
    %v1049 = vunpack.c.l.b16 %v1017
    %v1050 = vunpack.c.l.b16 %v1018
    %v1051 = vunpack.c.l.b16 %v1019
    %v1052 = vunpack.c.l.b16 %v1020
    %v1053 = vunpack.c.l.b16 %v1021
    %v1054 = vunpack.c.l.b16 %v1022
    %v1055 = vpack.c.b16 %v1040, %v1039
    %v1056 = vpack.c.b16 %v1042, %v1041
    %v1057 = vpack.c.b16 %v1044, %v1043
    %v1058 = vpack.c.b16 %v1046, %v1045
    %v1059 = vpack.c.b16 %v1048, %v1047
    %v1060 = vpack.c.b16 %v1050, %v1049
    %v1061 = vpack.c.b16 %v1052, %v1051
    %v1062 = vpack.c.b16 %v1054, %v1053
    %1071 = vmatprep.subr.bf16.mxu0 0
    %1072 = vmatpush1.bf16.msra.mxu0 %v1055
    %1073 = vmatprep.subr.bf16.mxu0 0
    %1074 = vmatpush1.bf16.msra.mxu0 %v1056
    %1075 = vmatprep.subr.bf16.mxu0 0
    %1076 = vmatpush1.bf16.msra.mxu0 %v1057
    %1077 = vmatprep.subr.bf16.mxu0 0
    %1078 = vmatpush1.bf16.msra.mxu0 %v1058
    %1079 = vmatprep.subr.bf16.mxu0 0
    %1080 = vmatpush1.bf16.msra.mxu0 %v1059
    %1081 = vmatprep.subr.bf16.mxu0 0
    %1082 = vmatpush1.bf16.msra.mxu0 %v1060
    %1083 = vmatprep.subr.bf16.mxu0 0
    %1084 = vmatpush1.bf16.msra.mxu0 %v1061
    %1085 = vmatprep.subr.bf16.mxu0 0
    %1086 = vmatpush1.bf16.msra.mxu0 %v1062
    %1087 = vmatprep.subr.bf16.mxu0 0
    %1088 = vmatpush1.bf16.msra.mxu0 0
    %1089 = vmatprep.subr.bf16.mxu0 0
    %1090 = vmatpush1.bf16.msra.mxu0 0
    %1091 = vmatprep.subr.bf16.mxu0 0
    %1092 = vmatpush1.bf16.msra.mxu0 0
    %1093 = vmatprep.subr.bf16.mxu0 0
    %1094 = vmatpush1.bf16.msra.mxu0 0
    %1095 = vmatprep.subr.bf16.mxu0 0
    %1096 = vmatpush1.bf16.msra.mxu0 0
    %1097 = vmatprep.subr.bf16.mxu0 0
    %1098 = vmatpush1.bf16.msra.mxu0 0
    %1099 = vmatprep.subr.bf16.mxu0 0
    %1100 = vmatpush1.bf16.msra.mxu0 0
    %1101 = vmatprep.subr.bf16.mxu0 0
    %1102 = vmatpush1.bf16.msra.mxu0 0
    %1103 = vmatprep.mubr.bf16.mxu0 0
    %1104 = vmatmul.mubr.bf16.gmra.mrb[0].mxu0 %v149
    %v1105 = vpop.f32.mrb[0].mxu0
    %v1106 = vadd.f32 0.0, %v1105
    %v1107 = vpop.f32.mrb[0].mxu0
    %v1108 = vpop.f32.mrb[0].mxu0
    %v1109 = vadd.f32 0.0, %v1108
    %v1110 = vpop.f32.mrb[0].mxu0
    %1111 = vdwg.mxu0
    %v1128 = vunpack.c.l.b16 %v975
    %v1129 = vunpack.c.l.b16 %v976
    %v1130 = vunpack.c.l.b16 %v977
    %v1131 = vunpack.c.l.b16 %v978
    %v1132 = vunpack.c.l.b16 %v979
    %v1133 = vunpack.c.l.b16 %v980
    %v1134 = vunpack.c.l.b16 %v981
    %v1135 = vunpack.c.l.b16 %v982
    %v1136 = vunpack.c.l.b16 %v983
    %v1137 = vunpack.c.l.b16 %v984
    %v1138 = vunpack.c.l.b16 %v985
    %v1139 = vunpack.c.l.b16 %v986
    %v1140 = vunpack.c.l.b16 %v987
    %v1141 = vunpack.c.l.b16 %v988
    %v1142 = vunpack.c.l.b16 %v989
    %v1143 = vunpack.c.l.b16 %v990
    %vm1144 = vcmask 1041409
    %v1145 = vsel %vm1144, %v1129, %v1128
    %vm1146 = vcmask 1042434
    %v1147 = vsel %vm1146, %v1130, %v1145
    %vm1148 = vcmask 1043459
    %v1149 = vsel %vm1148, %v1131, %v1147
    %vm1150 = vcmask 1044484
    %v1151 = vsel %vm1150, %v1132, %v1149
    %vm1152 = vcmask 1045509
    %v1153 = vsel %vm1152, %v1133, %v1151
    %vm1154 = vcmask 1046534
    %v1155 = vsel %vm1154, %v1134, %v1153
    %vm1156 = vcmask 1047559
    %v1157 = vsel %vm1156, %v1135, %v1155
    %v1158 = vsel %vm1144, %v1137, %v1136
    %v1159 = vsel %vm1146, %v1138, %v1158
    %v1160 = vsel %vm1148, %v1139, %v1159
    %v1161 = vsel %vm1150, %v1140, %v1160
    %v1162 = vsel %vm1152, %v1141, %v1161
    %v1163 = vsel %vm1154, %v1142, %v1162
    %v1164 = vsel %vm1156, %v1143, %v1163
    %v1165 = vpack.c.b16 %v1164, %v1157
    %v1183 = vunpack.c.l.b16 %v991
    %v1184 = vunpack.c.l.b16 %v992
    %v1185 = vunpack.c.l.b16 %v993
    %v1186 = vunpack.c.l.b16 %v994
    %v1187 = vunpack.c.l.b16 %v995
    %v1188 = vunpack.c.l.b16 %v996
    %v1189 = vunpack.c.l.b16 %v997
    %v1190 = vunpack.c.l.b16 %v998
    %v1191 = vunpack.c.l.b16 %v999
    %v1192 = vunpack.c.l.b16 %v1000
    %v1193 = vunpack.c.l.b16 %v1001
    %v1194 = vunpack.c.l.b16 %v1002
    %v1195 = vunpack.c.l.b16 %v1003
    %v1196 = vunpack.c.l.b16 %v1004
    %v1197 = vunpack.c.l.b16 %v1005
    %v1198 = vunpack.c.l.b16 %v1006
    %v1199 = vpack.c.b16 %v1184, %v1183
    %v1200 = vpack.c.b16 %v1186, %v1185
    %v1201 = vpack.c.b16 %v1188, %v1187
    %v1202 = vpack.c.b16 %v1190, %v1189
    %v1203 = vpack.c.b16 %v1192, %v1191
    %v1204 = vpack.c.b16 %v1194, %v1193
    %v1205 = vpack.c.b16 %v1196, %v1195
    %v1206 = vpack.c.b16 %v1198, %v1197
    %1215 = vmatprep.subr.bf16.mxu0 0
    %1216 = vmatpush1.bf16.msra.mxu0 %v1199
    %1217 = vmatprep.subr.bf16.mxu0 0
    %1218 = vmatpush1.bf16.msra.mxu0 %v1200
    %1219 = vmatprep.subr.bf16.mxu0 0
    %1220 = vmatpush1.bf16.msra.mxu0 %v1201
    %1221 = vmatprep.subr.bf16.mxu0 0
    %1222 = vmatpush1.bf16.msra.mxu0 %v1202
    %1223 = vmatprep.subr.bf16.mxu0 0
    %1224 = vmatpush1.bf16.msra.mxu0 %v1203
    %1225 = vmatprep.subr.bf16.mxu0 0
    %1226 = vmatpush1.bf16.msra.mxu0 %v1204
    %1227 = vmatprep.subr.bf16.mxu0 0
    %1228 = vmatpush1.bf16.msra.mxu0 %v1205
    %1229 = vmatprep.subr.bf16.mxu0 0
    %1230 = vmatpush1.bf16.msra.mxu0 %v1206
    %1231 = vmatprep.subr.bf16.mxu0 0
    %1232 = vmatpush1.bf16.msra.mxu0 0
    %1233 = vmatprep.subr.bf16.mxu0 0
    %1234 = vmatpush1.bf16.msra.mxu0 0
    %1235 = vmatprep.subr.bf16.mxu0 0
    %1236 = vmatpush1.bf16.msra.mxu0 0
    %1237 = vmatprep.subr.bf16.mxu0 0
    %1238 = vmatpush1.bf16.msra.mxu0 0
    %1239 = vmatprep.subr.bf16.mxu0 0
    %1240 = vmatpush1.bf16.msra.mxu0 0
    %1241 = vmatprep.subr.bf16.mxu0 0
    %1242 = vmatpush1.bf16.msra.mxu0 0
    %1243 = vmatprep.subr.bf16.mxu0 0
    %1244 = vmatpush1.bf16.msra.mxu0 0
    %1245 = vmatprep.subr.bf16.mxu0 0
    %1246 = vmatpush1.bf16.msra.mxu0 0
    %1247 = vmatprep.mubr.bf16.mxu0 0
    %1248 = vmatmul.mubr.bf16.gmra.mrb[0].mxu0 %v1165
    %v1249 = vpop.f32.mrb[0].mxu0
    %v1250 = vadd.f32 %v1106, %v1249
    %v1251 = vpop.f32.mrb[0].mxu0
    %v1252 = vpop.f32.mrb[0].mxu0
    %v1253 = vadd.f32 %v1109, %v1252
    %v1254 = vpop.f32.mrb[0].mxu0
    %1255 = vdwg.mxu0
    %v1256 = vmax.f32 %v1250, 0.0
    %v1257 = vmax.f32 %v1253, 0.0
    %v1258 = vpack.c.bf16 %v1257, %v1256
    %v1259 = vld [vmem:[%s2] sm:$0x1]
    %v1261 = vpack.i.b16 %v1259, %v1259
    %v1263 = vlaneseq
    %v1264 = vshrl.u32 %v1263, 7
    %v1265 = vsub.s32 0, %v1264
    %v1266 = vrot.slane %v1261, %v1265
    %1268 = vbcast.lane.c.b16.xlu0 %v1266, 256
    %v1269 = vpop.permute.xlu0 %1268
    %v1270 = vshrl.u32 %v1259, 16
    %v1271 = vpack.i.b16 %v1270, %v1270
    %v1273 = vlaneseq
    %v1274 = vshrl.u32 %v1273, 7
    %v1275 = vsub.s32 0, %v1274
    %v1276 = vrot.slane %v1271, %v1275
    %1278 = vbcast.lane.c.b16.xlu0 %v1276, 256
    %v1279 = vpop.permute.xlu0 %1278
    %vm1280 = vcmp.gt.bf16.partialorder %v1269, 0
    %vm1281 = vcmp.gt.bf16.partialorder %v1279, 0
    %v1282 = vsel %vm1280, 65537, 0
    %v1283 = vsel %vm1281, 65537, 0
    %v1284 = vunpack.c.l.b16 %v1282
    %v1285 = vunpack.c.l.b16 %v1283
    %vm1286 = vcmp.ne.s32.totalorder %v1284, 0
    %vm1287 = vcmp.ne.s32.totalorder %v1285, 0
    %v1288 = vsel %vm1286, 1, 0
    %v1289 = vsel %vm1287, 1, 0
    %1290 = vset.pattern.permute.xlu0 0
    %1291 = vperm.xlu0 %1290, %v1288
    %v1292 = vpop.permute.xlu0 %1291
    %1293 = vset.pattern.permute.xlu0 0
    %1294 = vperm.xlu0 %1293, %v1289
    %v1295 = vpop.permute.xlu0 %1294
    %vm1296 = vcmp.eq.s32.totalorder %v1292, 1
    %vm1297 = vcmp.eq.s32.totalorder %v1295, 1
    %v1298 = vsel %vm1296, %v1256, -1e+30
    %v1299 = vsel %vm1297, %v1256, -1e+30
    %v1300 = vrot.slane %v1298, 4
    %v1301 = vmax.f32 %v1298, %v1300
    %v1302 = vrot.slane %v1301, 2
    %v1303 = vmax.f32 %v1301, %v1302
    %v1304 = vrot.slane %v1303, 1
    %v1305 = vmax.f32 %v1303, %v1304
    %v1306 = vrot.slane %v1299, 4
    %v1307 = vmax.f32 %v1299, %v1306
    %v1308 = vrot.slane %v1307, 2
    %v1309 = vmax.f32 %v1307, %v1308
    %v1310 = vrot.slane %v1309, 1
    %v1311 = vmax.f32 %v1309, %v1310
    %v1312 = vmax.f32 %v1305, -1e+30
    %v1313 = vmax.f32 %v1311, -1e+30
    %s1315 = sor.u32 256, 8
    %1316 = vbcast.lane.c.b16.xlu0 %v1266, %s1315
    %v1317 = vpop.permute.xlu0 %1316
    %s1319 = sor.u32 256, 8
    %1320 = vbcast.lane.c.b16.xlu0 %v1276, %s1319
    %v1321 = vpop.permute.xlu0 %1320
    %vm1322 = vcmp.gt.bf16.partialorder %v1317, 0
    %vm1323 = vcmp.gt.bf16.partialorder %v1321, 0
    %v1324 = vsel %vm1322, 65537, 0
    %v1325 = vsel %vm1323, 65537, 0
    %v1326 = vunpack.c.l.b16 %v1324
    %v1327 = vunpack.c.l.b16 %v1325
    %vm1328 = vcmp.ne.s32.totalorder %v1326, 0
    %vm1329 = vcmp.ne.s32.totalorder %v1327, 0
    %v1330 = vsel %vm1328, 1, 0
    %v1331 = vsel %vm1329, 1, 0
    %1332 = vset.pattern.permute.xlu0 0
    %1333 = vperm.xlu0 %1332, %v1330
    %v1334 = vpop.permute.xlu0 %1333
    %1335 = vset.pattern.permute.xlu0 0
    %1336 = vperm.xlu0 %1335, %v1331
    %v1337 = vpop.permute.xlu0 %1336
    %vm1338 = vcmp.eq.s32.totalorder %v1334, 1
    %vm1339 = vcmp.eq.s32.totalorder %v1337, 1
    %v1340 = vsel %vm1338, %v1257, -1e+30
    %v1341 = vsel %vm1339, %v1257, -1e+30
    %v1342 = vrot.slane %v1340, 4
    %v1343 = vmax.f32 %v1340, %v1342
    %v1344 = vrot.slane %v1343, 2
    %v1345 = vmax.f32 %v1343, %v1344
    %v1346 = vrot.slane %v1345, 1
    %v1347 = vmax.f32 %v1345, %v1346
    %v1348 = vrot.slane %v1341, 4
    %v1349 = vmax.f32 %v1341, %v1348
    %v1350 = vrot.slane %v1349, 2
    %v1351 = vmax.f32 %v1349, %v1350
    %v1352 = vrot.slane %v1351, 1
    %v1353 = vmax.f32 %v1351, %v1352
    %v1354 = vmax.f32 %v1312, %v1347
    %v1355 = vmax.f32 %v1313, %v1353
    %v1356 = vunpack.c.l.bf16 %v1259
    %vm1357 = vcmask 123904
    %v1358 = vsel %vm1357, %v1356, 0.0
    %1359 = vadd.xlane.f32.xlu0 %v1358
    %v1360 = vpop.xlane.xlu0 %1359
    %v1361 = vmax.f32 %v1360, 1.0
    %v1362 = vrcp.pop %v1361
    %v1363 = vmul.f32 1.0, %v1362
    %vm1364 = vcmask 130048
    %v1365 = vsel %vm1364, %v1259, 0
    %1367 = vmatprep.subr.bf16.mxu0 0
    %1368 = vmatpush1.bf16.msra.mxu0 %v1258
    %1369 = vmatprep.subr.bf16.mxu0 0
    %1370 = vmatpush1.bf16.msra.mxu0 0
    %1371 = vmatprep.subr.bf16.mxu0 0
    %1372 = vmatpush1.bf16.msra.mxu0 0
    %1373 = vmatprep.subr.bf16.mxu0 0
    %1374 = vmatpush1.bf16.msra.mxu0 0
    %1375 = vmatprep.subr.bf16.mxu0 0
    %1376 = vmatpush1.bf16.msra.mxu0 0
    %1377 = vmatprep.subr.bf16.mxu0 0
    %1378 = vmatpush1.bf16.msra.mxu0 0
    %1379 = vmatprep.subr.bf16.mxu0 0
    %1380 = vmatpush1.bf16.msra.mxu0 0
    %1381 = vmatprep.subr.bf16.mxu0 0
    %1382 = vmatpush1.bf16.msra.mxu0 0
    %1383 = vmatprep.subr.bf16.mxu0 0
    %1384 = vmatpush1.bf16.msra.mxu0 0
    %1385 = vmatprep.subr.bf16.mxu0 0
    %1386 = vmatpush1.bf16.msra.mxu0 0
    %1387 = vmatprep.subr.bf16.mxu0 0
    %1388 = vmatpush1.bf16.msra.mxu0 0
    %1389 = vmatprep.subr.bf16.mxu0 0
    %1390 = vmatpush1.bf16.msra.mxu0 0
    %1391 = vmatprep.subr.bf16.mxu0 0
    %1392 = vmatpush1.bf16.msra.mxu0 0
    %1393 = vmatprep.subr.bf16.mxu0 0
    %1394 = vmatpush1.bf16.msra.mxu0 0
    %1395 = vmatprep.subr.bf16.mxu0 0
    %1396 = vmatpush1.bf16.msra.mxu0 0
    %1397 = vmatprep.subr.bf16.mxu0 0
    %1398 = vmatpush1.bf16.msra.mxu0 0
    %1399 = vmatprep.mubr.bf16.mxu0 0
    %1400 = vmatmul.mubr.bf16.gmra.mrb[0].mxu0 %v1365
    %v1401 = vpop.f32.mrb[0].mxu0
    %v1402 = vadd.f32 0.0, %v1401
    %v1403 = vpop.f32.mrb[0].mxu0
    %v1404 = vpop.f32.mrb[0].mxu0
    %v1405 = vpop.f32.mrb[0].mxu0
    %1406 = vdwg.mxu0
    %v1407 = vmul.f32 %v1402, %v1363
    %v1408 = vpack.c.bf16 %v1354, %v1354
    %v1409 = vpack.c.bf16 %v1355, %v1355
    %v1410 = vld [vmem:[#allocation10] sm:$0xf]
    %v1411 = vld [vmem:[#allocation10 + $0x4] sm:$0xf]
    %v1412 = vld [vmem:[#allocation10 + $0x8] sm:$0xf]
    %v1413 = vld [vmem:[#allocation10 + $0xc] sm:$0xf]
    %v1414 = vld [vmem:[#allocation10 + $0x10] sm:$0xf]
    %v1415 = vld [vmem:[#allocation10 + $0x14] sm:$0xf]
    %v1416 = vld [vmem:[#allocation10 + $0x18] sm:$0xf]
    %v1417 = vld [vmem:[#allocation10 + $0x1c] sm:$0xf]
    %v1418 = vld [vmem:[#allocation10 + $0x20] sm:$0xf]
    %v1419 = vld [vmem:[#allocation10 + $0x24] sm:$0xf]
    %v1420 = vld [vmem:[#allocation10 + $0x28] sm:$0xf]
    %v1421 = vld [vmem:[#allocation10 + $0x2c] sm:$0xf]
    %v1422 = vld [vmem:[#allocation10 + $0x30] sm:$0xf]
    %v1423 = vld [vmem:[#allocation10 + $0x34] sm:$0xf]
    %v1424 = vld [vmem:[#allocation10 + $0x38] sm:$0xf]
    %v1425 = vld [vmem:[#allocation10 + $0x3c] sm:$0xf]
    %v1426 = vpack.c.bf16 %v1407, %v1407
    %v1427 = vld [vmem:[%s8] sm:$0xf]
    %v1428 = vld [vmem:[%s8 + $0x4] sm:$0xf]
    %v1429 = vld [vmem:[%s8 + $0x8] sm:$0xf]
    %v1430 = vld [vmem:[%s8 + $0xc] sm:$0xf]
    %v1431 = vld [vmem:[%s8 + $0x10] sm:$0xf]
    %v1432 = vld [vmem:[%s8 + $0x14] sm:$0xf]
    %v1433 = vld [vmem:[%s8 + $0x18] sm:$0xf]
    %v1434 = vld [vmem:[%s8 + $0x1c] sm:$0xf]
    %v1435 = vld [vmem:[%s8 + $0x20] sm:$0xf]
    %v1436 = vld [vmem:[%s8 + $0x24] sm:$0xf]
    %v1437 = vld [vmem:[%s8 + $0x28] sm:$0xf]
    %v1438 = vld [vmem:[%s8 + $0x2c] sm:$0xf]
    %v1439 = vld [vmem:[%s8 + $0x30] sm:$0xf]
    %v1440 = vld [vmem:[%s8 + $0x34] sm:$0xf]
    %v1441 = vld [vmem:[%s8 + $0x38] sm:$0xf]
    %v1442 = vld [vmem:[%s8 + $0x3c] sm:$0xf]
    %v1459 = vunpack.c.l.b16 %v1427
    %v1460 = vunpack.c.l.b16 %v1428
    %v1461 = vunpack.c.l.b16 %v1429
    %v1462 = vunpack.c.l.b16 %v1430
    %v1463 = vunpack.c.l.b16 %v1431
    %v1464 = vunpack.c.l.b16 %v1432
    %v1465 = vunpack.c.l.b16 %v1433
    %v1466 = vunpack.c.l.b16 %v1434
    %v1467 = vunpack.c.l.b16 %v1435
    %v1468 = vunpack.c.l.b16 %v1436
    %v1469 = vunpack.c.l.b16 %v1437
    %v1470 = vunpack.c.l.b16 %v1438
    %v1471 = vunpack.c.l.b16 %v1439
    %v1472 = vunpack.c.l.b16 %v1440
    %v1473 = vunpack.c.l.b16 %v1441
    %v1474 = vunpack.c.l.b16 %v1442
    %v1475 = vpack.c.b16 %v1460, %v1459
    %v1476 = vpack.c.b16 %v1462, %v1461
    %v1477 = vpack.c.b16 %v1464, %v1463
    %v1478 = vpack.c.b16 %v1466, %v1465
    %v1479 = vpack.c.b16 %v1468, %v1467
    %v1480 = vpack.c.b16 %v1470, %v1469
    %v1481 = vpack.c.b16 %v1472, %v1471
    %v1482 = vpack.c.b16 %v1474, %v1473
    %1491 = vmatprep.subr.bf16.mxu0 0
    %1492 = vmatpush1.bf16.msra.mxu0 %v1475
    %1493 = vmatprep.subr.bf16.mxu0 0
    %1494 = vmatpush1.bf16.msra.mxu0 %v1476
    %1495 = vmatprep.subr.bf16.mxu0 0
    %1496 = vmatpush1.bf16.msra.mxu0 %v1477
    %1497 = vmatprep.subr.bf16.mxu0 0
    %1498 = vmatpush1.bf16.msra.mxu0 %v1478
    %1499 = vmatprep.subr.bf16.mxu0 0
    %1500 = vmatpush1.bf16.msra.mxu0 %v1479
    %1501 = vmatprep.subr.bf16.mxu0 0
    %1502 = vmatpush1.bf16.msra.mxu0 %v1480
    %1503 = vmatprep.subr.bf16.mxu0 0
    %1504 = vmatpush1.bf16.msra.mxu0 %v1481
    %1505 = vmatprep.subr.bf16.mxu0 0
    %1506 = vmatpush1.bf16.msra.mxu0 %v1482
    %1507 = vmatprep.subr.bf16.mxu0 0
    %1508 = vmatpush1.bf16.msra.mxu0 0
    %1509 = vmatprep.subr.bf16.mxu0 0
    %1510 = vmatpush1.bf16.msra.mxu0 0
    %1511 = vmatprep.subr.bf16.mxu0 0
    %1512 = vmatpush1.bf16.msra.mxu0 0
    %1513 = vmatprep.subr.bf16.mxu0 0
    %1514 = vmatpush1.bf16.msra.mxu0 0
    %1515 = vmatprep.subr.bf16.mxu0 0
    %1516 = vmatpush1.bf16.msra.mxu0 0
    %1517 = vmatprep.subr.bf16.mxu0 0
    %1518 = vmatpush1.bf16.msra.mxu0 0
    %1519 = vmatprep.subr.bf16.mxu0 0
    %1520 = vmatpush1.bf16.msra.mxu0 0
    %1521 = vmatprep.subr.bf16.mxu0 0
    %1522 = vmatpush1.bf16.msra.mxu0 0
    %1523 = vmatprep.mubr.bf16.mxu0 0
    %1524 = vmatmul.mubr.bf16.gmra.mrb[0].mxu0 %v1426
    %v1525 = vpop.f32.mrb[0].mxu0
    %v1526 = vadd.f32 0.0, %v1525
    %v1527 = vpop.f32.mrb[0].mxu0
    %v1528 = vpop.f32.mrb[0].mxu0
    %v1529 = vpop.f32.mrb[0].mxu0
    %1530 = vdwg.mxu0
    %v1533 = vunpack.c.l.b16 %v1408
    %v1534 = vunpack.c.l.b16 %v1409
    %v1535 = vsel %vm1144, %v1534, %v1533
    %v1536 = vpack.c.b16 %v1535, %v1535
    %v1554 = vunpack.c.l.b16 %v1410
    %v1555 = vunpack.c.l.b16 %v1411
    %v1556 = vunpack.c.l.b16 %v1412
    %v1557 = vunpack.c.l.b16 %v1413
    %v1558 = vunpack.c.l.b16 %v1414
    %v1559 = vunpack.c.l.b16 %v1415
    %v1560 = vunpack.c.l.b16 %v1416
    %v1561 = vunpack.c.l.b16 %v1417
    %v1562 = vunpack.c.l.b16 %v1418
    %v1563 = vunpack.c.l.b16 %v1419
    %v1564 = vunpack.c.l.b16 %v1420
    %v1565 = vunpack.c.l.b16 %v1421
    %v1566 = vunpack.c.l.b16 %v1422
    %v1567 = vunpack.c.l.b16 %v1423
    %v1568 = vunpack.c.l.b16 %v1424
    %v1569 = vunpack.c.l.b16 %v1425
    %v1570 = vpack.c.b16 %v1555, %v1554
    %v1571 = vpack.c.b16 %v1557, %v1556
    %v1572 = vpack.c.b16 %v1559, %v1558
    %v1573 = vpack.c.b16 %v1561, %v1560
    %v1574 = vpack.c.b16 %v1563, %v1562
    %v1575 = vpack.c.b16 %v1565, %v1564
    %v1576 = vpack.c.b16 %v1567, %v1566
    %v1577 = vpack.c.b16 %v1569, %v1568
    %1586 = vmatprep.subr.bf16.mxu0 0
    %1587 = vmatpush1.bf16.msra.mxu0 %v1570
    %1588 = vmatprep.subr.bf16.mxu0 0
    %1589 = vmatpush1.bf16.msra.mxu0 %v1571
    %1590 = vmatprep.subr.bf16.mxu0 0
    %1591 = vmatpush1.bf16.msra.mxu0 %v1572
    %1592 = vmatprep.subr.bf16.mxu0 0
    %1593 = vmatpush1.bf16.msra.mxu0 %v1573
    %1594 = vmatprep.subr.bf16.mxu0 0
    %1595 = vmatpush1.bf16.msra.mxu0 %v1574
    %1596 = vmatprep.subr.bf16.mxu0 0
    %1597 = vmatpush1.bf16.msra.mxu0 %v1575
    %1598 = vmatprep.subr.bf16.mxu0 0
    %1599 = vmatpush1.bf16.msra.mxu0 %v1576
    %1600 = vmatprep.subr.bf16.mxu0 0
    %1601 = vmatpush1.bf16.msra.mxu0 %v1577
    %1602 = vmatprep.subr.bf16.mxu0 0
    %1603 = vmatpush1.bf16.msra.mxu0 0
    %1604 = vmatprep.subr.bf16.mxu0 0
    %1605 = vmatpush1.bf16.msra.mxu0 0
    %1606 = vmatprep.subr.bf16.mxu0 0
    %1607 = vmatpush1.bf16.msra.mxu0 0
    %1608 = vmatprep.subr.bf16.mxu0 0
    %1609 = vmatpush1.bf16.msra.mxu0 0
    %1610 = vmatprep.subr.bf16.mxu0 0
    %1611 = vmatpush1.bf16.msra.mxu0 0
    %1612 = vmatprep.subr.bf16.mxu0 0
    %1613 = vmatpush1.bf16.msra.mxu0 0
    %1614 = vmatprep.subr.bf16.mxu0 0
    %1615 = vmatpush1.bf16.msra.mxu0 0
    %1616 = vmatprep.subr.bf16.mxu0 0
    %1617 = vmatpush1.bf16.msra.mxu0 0
    %1618 = vmatprep.mubr.bf16.mxu0 0
    %1619 = vmatmul.mubr.bf16.gmra.mrb[0].mxu0 %v1536
    %v1620 = vpop.f32.mrb[0].mxu0
    %v1621 = vadd.f32 %v1526, %v1620
    %v1622 = vpop.f32.mrb[0].mxu0
    %v1623 = vpop.f32.mrb[0].mxu0
    %v1624 = vpop.f32.mrb[0].mxu0
    %1625 = vdwg.mxu0
    %v1626 = vld [vmem:[%s9] sm:$0x1]
    %v1628 = vlaneseq
    %v1629 = vshrl.u32 %v1628, 7
    %v1630 = vsub.s32 0, %v1629
    %v1631 = vrot.slane %v1626, %v1630
    %v1633 = vadd.f32 %v1621, %v1631
    %v1634 = vmax.f32 %v1633, 0.0
    %v1635 = vpack.c.bf16 %v1634, %v1634
    %v1636 = vld [vmem:[%s10] sm:$0xf]
    %v1637 = vld [vmem:[%s10 + $0x4] sm:$0xf]
    %v1638 = vld [vmem:[%s10 + $0x8] sm:$0xf]
    %v1639 = vld [vmem:[%s10 + $0xc] sm:$0xf]
    %v1640 = vld [vmem:[%s10 + $0x10] sm:$0xf]
    %v1641 = vld [vmem:[%s10 + $0x14] sm:$0xf]
    %v1642 = vld [vmem:[%s10 + $0x18] sm:$0xf]
    %v1643 = vld [vmem:[%s10 + $0x1c] sm:$0xf]
    %v1644 = vld [vmem:[%s10 + $0x20] sm:$0xf]
    %v1645 = vld [vmem:[%s10 + $0x24] sm:$0xf]
    %v1646 = vld [vmem:[%s10 + $0x28] sm:$0xf]
    %v1647 = vld [vmem:[%s10 + $0x2c] sm:$0xf]
    %v1648 = vld [vmem:[%s10 + $0x30] sm:$0xf]
    %v1649 = vld [vmem:[%s10 + $0x34] sm:$0xf]
    %v1650 = vld [vmem:[%s10 + $0x38] sm:$0xf]
    %v1651 = vld [vmem:[%s10 + $0x3c] sm:$0xf]
    %v1652 = vld [vmem:[%s11] sm:$0x1]
    %v1654 = vlaneseq
    %v1655 = vshrl.u32 %v1654, 7
    %v1656 = vsub.s32 0, %v1655
    %v1657 = vrot.slane %v1652, %v1656
    %v1675 = vunpack.c.l.b16 %v1636
    %v1676 = vunpack.c.l.b16 %v1637
    %v1677 = vunpack.c.l.b16 %v1638
    %v1678 = vunpack.c.l.b16 %v1639
    %v1679 = vunpack.c.l.b16 %v1640
    %v1680 = vunpack.c.l.b16 %v1641
    %v1681 = vunpack.c.l.b16 %v1642
    %v1682 = vunpack.c.l.b16 %v1643
    %v1683 = vunpack.c.l.b16 %v1644
    %v1684 = vunpack.c.l.b16 %v1645
    %v1685 = vunpack.c.l.b16 %v1646
    %v1686 = vunpack.c.l.b16 %v1647
    %v1687 = vunpack.c.l.b16 %v1648
    %v1688 = vunpack.c.l.b16 %v1649
    %v1689 = vunpack.c.l.b16 %v1650
    %v1690 = vunpack.c.l.b16 %v1651
    %v1691 = vpack.c.b16 %v1676, %v1675
    %v1692 = vpack.c.b16 %v1678, %v1677
    %v1693 = vpack.c.b16 %v1680, %v1679
    %v1694 = vpack.c.b16 %v1682, %v1681
    %v1695 = vpack.c.b16 %v1684, %v1683
    %v1696 = vpack.c.b16 %v1686, %v1685
    %v1697 = vpack.c.b16 %v1688, %v1687
    %v1698 = vpack.c.b16 %v1690, %v1689
    %1707 = vmatprep.subr.bf16.mxu0 0
    %1708 = vmatpush1.bf16.msra.mxu0 %v1691
    %1709 = vmatprep.subr.bf16.mxu0 0
    %1710 = vmatpush1.bf16.msra.mxu0 %v1692
    %1711 = vmatprep.subr.bf16.mxu0 0
    %1712 = vmatpush1.bf16.msra.mxu0 %v1693
    %1713 = vmatprep.subr.bf16.mxu0 0
    %1714 = vmatpush1.bf16.msra.mxu0 %v1694
    %1715 = vmatprep.subr.bf16.mxu0 0
    %1716 = vmatpush1.bf16.msra.mxu0 %v1695
    %1717 = vmatprep.subr.bf16.mxu0 0
    %1718 = vmatpush1.bf16.msra.mxu0 %v1696
    %1719 = vmatprep.subr.bf16.mxu0 0
    %1720 = vmatpush1.bf16.msra.mxu0 %v1697
    %1721 = vmatprep.subr.bf16.mxu0 0
    %1722 = vmatpush1.bf16.msra.mxu0 %v1698
    %1723 = vmatprep.subr.bf16.mxu0 0
    %1724 = vmatpush1.bf16.msra.mxu0 0
    %1725 = vmatprep.subr.bf16.mxu0 0
    %1726 = vmatpush1.bf16.msra.mxu0 0
    %1727 = vmatprep.subr.bf16.mxu0 0
    %1728 = vmatpush1.bf16.msra.mxu0 0
    %1729 = vmatprep.subr.bf16.mxu0 0
    %1730 = vmatpush1.bf16.msra.mxu0 0
    %1731 = vmatprep.subr.bf16.mxu0 0
    %1732 = vmatpush1.bf16.msra.mxu0 0
    %1733 = vmatprep.subr.bf16.mxu0 0
    %1734 = vmatpush1.bf16.msra.mxu0 0
    %1735 = vmatprep.subr.bf16.mxu0 0
    %1736 = vmatpush1.bf16.msra.mxu0 0
    %1737 = vmatprep.subr.bf16.mxu0 0
    %1738 = vmatpush1.bf16.msra.mxu0 0
    %1739 = vmatprep.mubr.bf16.mxu0 0
    %1740 = vmatmul.mubr.bf16.gmra.mrb[0].mxu0 %v1635
    %v1741 = vpop.f32.mrb[0].mxu0
    %v1742 = vadd.f32 %v1657, %v1741
    %v1743 = vpop.f32.mrb[0].mxu0
    %v1744 = vpop.f32.mrb[0].mxu0
    %v1745 = vpop.f32.mrb[0].mxu0
    %1746 = vdwg.mxu0
    %v1747 = vmax.f32 %v1742, 0.0
    %v1748 = vld [vmem:[%s12] sm:$0x1]
    %v1750 = vlaneseq
    %v1751 = vshrl.u32 %v1750, 7
    %v1752 = vsub.s32 0, %v1751
    %v1753 = vrot.slane %v1748, %v1752
    %v1755 = vmul.f32 %v1747, %v1753
    %vm1756 = vcmask 517120
    %v1757 = vsel %vm1756, %v1755, 0.0
    %1758 = vadd.xlane.f32.xlu0 %v1757
    %v1759 = vpop.xlane.xlu0 %1758
    %v1760 = vld [vmem:[#allocation2] sm:$0x1]
    %v1762 = vlaneseq
    %v1763 = vshrl.u32 %v1762, 7
    %v1764 = vsub.s32 0, %v1763
    %v1765 = vrot.slane %v1760, %v1764
    %v1767 = vadd.f32 %v1759, %v1765
    %v1768 = vmul.f32 %v1767, 0.5
    %v1769 = vtanh.pop %v1768
    %v1770 = vadd.f32 %v1769, 1.0
    %v1771 = vmul.f32 %v1770, 0.5
    %vm1772 = vcmask 1024
    %1773 = vst.msk [vmem:[%s14] sm:$0x3] %vm1772, %v1771
    // Predicated region
    $region78: #{tpu_custom_call.1} parent=1 // pred_check
      _
    $region79: #{tpu_custom_call.1} parent=1 // pred_check_branch
      %1775 = sbr.rel (0) target = $region81
    $region80: #{tpu_custom_call.1} parent=1 // pred_region
      _
    $region81: #{tpu_custom_call.1} parent=1 // pred_fallthru
      _
    // Predicated region
    $region82: #{tpu_custom_call.1} parent=1 // pred_check
      _
    $region83: #{tpu_custom_call.1} parent=1 // pred_check_branch
      %1777 = sbr.rel (0) target = $region85
    $region84: #{tpu_custom_call.1} parent=1 // pred_region
      _
    $region85: #{tpu_custom_call.1} parent=1 // pred_fallthru
      _
    %1778 = vsyncpa [#allocation4], 1
    %1779 = vsyncpa [#allocation6], 1
    %1780 = vsyncpa [#allocation9], 1

</llo_original>
